<compile_context>
chip_gen: v7x
topology: tpu7x:2x2x1
jax: 0.10.0
libtpu: 0.0.40
codegen_flags: <defaults>
</compile_context>

<pallas_src>
import jax
import jax.numpy as jnp
from jax.experimental import pallas as pl
from jax.experimental.pallas import tpu as pltpu

# ---- "config" values (synthetic, small) --------------------------------------
NUM_CLASS = 4          # config.num_class
NH = 2                 # config.Nh
T = 16                 # config.T
DROPOUT = 0.5          # config.dropout (identity at inference)

H = 2 * NH             # input height = 4
W = T                  # input width  = 16
W2 = W // 2            # width after the stride-2 conv3 = 8
KW4 = 10               # conv4 kernel width
PAD4 = 4               # conv4 padding
WOUT = W2 + 2 * PAD4 - KW4 + 1   # width after conv4 = 7  (== blockOutputSize[1])
NCH = 120              # hidden channel count
NCHP = 128             # hidden channels padded to a full lane tile
CHW = NUM_CLASS * H * W          # 256: natural NCHW flatten of one sample (= K1)
KBIG = W2 * NCHP                 # 1024: fused (width-pos, padded-channel) dim (= K2)
B_TILE_MAX = 512       # batch lane tile (multiple of 128); keeps >=4 grid steps
                       # per v7x TensorCore once batch >= 2048, far below the
                       # v5e 16 MiB scoped-VMEM default at bf16


# ---- Pallas kernel -----------------------------------------------------------
def dnn_lst_kernel(xt_ref, w_ref, b13_ref, g_ref, bg_ref, out_ref):
    # xt_ref : (CHW, b_tile) bf16   -- batch on lanes
    # w_ref  : (KBIG, CHW)   bf16   -- fused conv1+conv2+conv3 (block-diag over w)
    # b13_ref: (KBIG, 1)     f32
    # g_ref  : (NUM_CLASS, KBIG) bf16 -- fused conv4+flatten+fc
    # bg_ref : (NUM_CLASS, 1) f32
    # out_ref: (NUM_CLASS, b_tile) f32  -- lane-dense output block

    # stage 1: one bf16 MXU matmul, M=1024, K=256, N=b_tile
    y = jnp.dot(w_ref[...], xt_ref[...], preferred_element_type=jnp.float32)
    y = jnp.maximum(y + b13_ref[...], 0.0)                 # bias + ReLU in f32

    # stage 2: one bf16 MXU matmul, M=num_class, K=1024, N=b_tile
    logits = jnp.dot(g_ref[...], y.astype(jnp.bfloat16),
                     preferred_element_type=jnp.float32)
    out_ref[...] = logits + bg_ref[...]


# ---- wrapper -----------------------------------------------------------------
def dnn_lst_forward(x_nchw, kparams, b_tile=None):
    w13bigT, b13t, gt, bgt = kparams
    B = x_nchw.shape[0]
    if b_tile is None:
        # lane-dense tile: multiple of 128, big enough to amortize per-step cost
        b_tile = min(B_TILE_MAX, max(128, pl.cdiv(B, 128) * 128))
    bp = pl.cdiv(B, b_tile) * b_tile

    # glue: natural NCHW flatten, bf16 cast, batch onto lanes, pad batch.
    xt = jnp.transpose(x_nchw.reshape(B, CHW).astype(jnp.bfloat16))    # (CHW, B)
    if bp != B:
        xt = jnp.pad(xt, ((0, 0), (0, bp - B)))

    out_t = pl.pallas_call(
        dnn_lst_kernel,
        out_shape=jax.ShapeDtypeStruct((NUM_CLASS, bp), jnp.float32),
        grid_spec=pltpu.PrefetchScalarGridSpec(
            num_scalar_prefetch=0,
            grid=(bp // b_tile,),
            in_specs=[
                pl.BlockSpec((CHW, b_tile), lambda i: (0, i)),           # x^T
                pl.BlockSpec((KBIG, CHW), lambda i: (0, 0)),             # W13big
                pl.BlockSpec((KBIG, 1), lambda i: (0, 0)),               # b13
                pl.BlockSpec((NUM_CLASS, KBIG), lambda i: (0, 0)),       # G^T
                pl.BlockSpec((NUM_CLASS, 1), lambda i: (0, 0)),          # bg
            ],
            out_specs=pl.BlockSpec((NUM_CLASS, b_tile), lambda i: (0, i)),
        ),
        compiler_params=pltpu.CompilerParams(
            dimension_semantics=("parallel",)),   # batch tiles are independent
    )(xt, w13bigT, b13t, gt, bgt)

    # tiny (num_class, B) transpose back; padded batch columns are sliced off.
    return jnp.transpose(out_t[:, :B])                     # (B, num_class)


# ---- deterministic parameter init (PyTorch-like uniform fan-in scaling) ------
def init_raw_params(key):
    ks = jax.random.split(key, 10)

    def u(k, shape, fan_in):
        bound = 1.0 / jnp.sqrt(jnp.float32(fan_in))
        return jax.random.uniform(k, shape, jnp.float32, -bound, bound)

    conv1_w = u(ks[0], (1, NUM_CLASS, 1, 1), NUM_CLASS)
    conv1_b = u(ks[1], (1,), NUM_CLASS)
    conv2_w = u(ks[2], (NCH, 1, H, 1), H)
    conv2_b = u(ks[3], (NCH,), H)
    conv3_w = u(ks[4], (NCH, NCH, 1, 2), NCH * 2)
    conv3_b = u(ks[5], (NCH,), NCH * 2)
    conv4_w = u(ks[6], (NCH, NCH, 1, KW4), NCH * KW4)
    conv4_b = u(ks[7], (NCH,), NCH * KW4)
    fc_w = u(ks[8], (NUM_CLASS, NCH * WOUT), NCH * WOUT)
    fc_b = u(ks[9], (NUM_CLASS,), NCH * WOUT)
    return (conv1_w, conv1_b, conv2_w, conv2_b, conv3_w, conv3_b,
            conv4_w, conv4_b, fc_w, fc_b)


# ---- host-side weight fusion --------------------------------------------------
def pack_kernel_params(raw):
    """Fuse (conv1,conv2,conv3) -> W13big/b13 and (conv4,flatten,fc) -> G^T/bg."""
    c1w, c1b, c2w, c2b, c3w, c3b, c4w, c4b, fcw, fcb = raw
    with jax.default_matmul_precision("highest"):
        w1 = c1w[0, :, 0, 0]              # (C,)
        b1 = c1b[0]                       # scalar
        w2 = c2w[:, 0, :, 0]              # (120, H)        [i, h]
        w3 = c3w[:, :, 0, :]              # (120, 120, 2)   [o, i, tap]
        w4 = c4w[:, :, 0, :]              # (120, 120, 10)  [o, i, k]

        # ---- stage 1: x[c,h,2*w2+tap] -> pre-ReLU y3[w2, o] --------------------
        a = jnp.einsum('ih,oit->hto', w2, w3)                       # (H, 2, 120)
        w13 = jnp.einsum('c,hto->chto', w1, a)                      # (C, H, 2, 120)
        b13 = jnp.einsum('oit,i->o', w3, b1 * jnp.sum(w2, axis=1) + c2b) + c3b

        # ---- stage 2: relu(y3)[w2, chan] -> logits[c] ---------------------------
        # torch Flatten order of y4 (B,120,1,WOUT) is index o*WOUT + wo.
        fcwr = fcw.reshape(NUM_CLASS, NCH, WOUT)                    # [c, o, wo]
        g_rows = []
        for w2i in range(W2):
            t = w2i + PAD4                # position in the zero-padded conv4 input
            acc = jnp.zeros((NCH, NUM_CLASS), jnp.float32)
            for wo in range(WOUT):
                k = t - wo
                if 0 <= k < KW4:
                    acc = acc + jnp.einsum('oi,co->ic', w4[:, :, k], fcwr[:, :, wo])
            g_rows.append(acc)
        g = jnp.stack(g_rows, axis=0)                               # (W2, 120, C)
        bg = jnp.einsum('o,cow->c', c4b, fcwr) + fcb                # (C,)

        # ---- assemble batch-on-lanes, single-matmul forms ----------------------
        # W13big^T: (W2*NCHP, C*H*W), block-diagonal over the width position so
        # the kernel consumes x in its natural NCHW-flatten layout.
        eye_w = jnp.eye(W2, dtype=jnp.float32)                      # [w_out, w_in]
        big = jnp.einsum('vw,chto->vochwt', eye_w, w13)             # (W2,120,C,H,W2,2)
        big = jnp.pad(big, ((0, 0), (0, NCHP - NCH),
                            (0, 0), (0, 0), (0, 0), (0, 0)))        # pad 120 -> 128
        w13bigT = big.reshape(KBIG, CHW).astype(jnp.bfloat16)       # (1024, 256)

        b13p = jnp.pad(b13, (0, NCHP - NCH))                        # (128,)
        b13t = jnp.tile(b13p, (W2,)).reshape(KBIG, 1)               # (1024, 1) f32

        gp = jnp.pad(g, ((0, 0), (0, NCHP - NCH), (0, 0)))          # (W2, 128, C)
        gt = jnp.transpose(gp, (2, 0, 1)).reshape(
            NUM_CLASS, KBIG).astype(jnp.bfloat16)                   # (4, 1024)
        bgt = bg.reshape(NUM_CLASS, 1)                              # (4, 1) f32
    return (w13bigT, b13t, gt, bgt)


# ---- pure-JAX layer-by-layer reference (NCHW, einsum-based) -------------------
def reference_forward(x, raw):
    c1w, c1b, c2w, c2b, c3w, c3b, c4w, c4b, fcw, fcb = raw
    with jax.default_matmul_precision("highest"):
        y1 = jnp.einsum('bchw,oc->bohw', x, c1w[:, :, 0, 0]) \
            + c1b[None, :, None, None]                                  # (B,1,H,W)
        y2 = jnp.einsum('bchw,och->bow', y1, c2w[:, :, :, 0]) \
            + c2b[None, :, None]                                        # (B,120,W)
        y2s = y2.reshape(y2.shape[0], NCH, W2, 2)
        y3 = jnp.einsum('biwk,oik->bow', y2s, c3w[:, :, 0, :]) \
            + c3b[None, :, None]                                        # (B,120,W2)
        y3 = jnp.maximum(y3, 0.0)
        y3p = jnp.pad(y3, ((0, 0), (0, 0), (PAD4, PAD4)))
        win = jnp.stack([y3p[:, :, k:k + WOUT] for k in range(KW4)], axis=-1)
        y4 = jnp.einsum('biwk,oik->bow', win, c4w[:, :, 0, :]) \
            + c4b[None, :, None]                                        # (B,120,WOUT)
        flat = y4.reshape(y4.shape[0], NCH * WOUT)
        return flat @ fcw.T + fcb[None, :]


if __name__ == "__main__":
    key = jax.random.PRNGKey(0)
    k_par, k_x = jax.random.split(key)
    raw = init_raw_params(k_par)
    kparams = pack_kernel_params(raw)

    B = 2
    x = jax.random.normal(k_x, (B, NUM_CLASS, H, W), jnp.float32)

    out = dnn_lst_forward(x, kparams)
    out = jax.block_until_ready(out)

    ref = jax.block_until_ready(reference_forward(x, raw))
    assert out.shape == (B, NUM_CLASS)
    assert jnp.allclose(out, ref, rtol=2e-2, atol=2e-2), (out, ref)
    print("KERNEL_OK")
</pallas_src>

<mosaic_0001>
module attributes {stable_mosaic.version = 11 : i64} {
  func.func @dnn_lst_kernel(%arg0: i32, %arg1: memref<256x128xbf16, #tpu.memory_space<vmem>>, %arg2: memref<1024x256xbf16, #tpu.memory_space<vmem>>, %arg3: memref<1024x1xf32, #tpu.memory_space<vmem>>, %arg4: memref<4x1024xbf16, #tpu.memory_space<vmem>>, %arg5: memref<4x1xf32, #tpu.memory_space<vmem>>, %arg6: memref<4x128xf32, #tpu.memory_space<vmem>>) attributes {dimension_semantics = [#tpu.dimension_semantics<parallel>], iteration_bounds = array<i64: 1>, scalar_prefetch = 0 : i64, scratch_operands = 0 : i64, tpu.core_type = #tpu.core_type<tc>, window_params = [{transform_indices = @transform_0, window_bounds = array<i64: 256, 128>}, {pipeline_mode = #tpu.pipeline_mode<synchronous>, transform_indices = @transform_1, window_bounds = array<i64: 1024, 256>}, {pipeline_mode = #tpu.pipeline_mode<synchronous>, transform_indices = @transform_2, window_bounds = array<i64: 1024, 1>}, {pipeline_mode = #tpu.pipeline_mode<synchronous>, transform_indices = @transform_3, window_bounds = array<i64: 4, 1024>}, {pipeline_mode = #tpu.pipeline_mode<synchronous>, transform_indices = @transform_4, window_bounds = array<i64: 4, 1>}, {transform_indices = @transform_5, window_bounds = array<i64: 4, 128>}]} {
    %c0 = arith.constant 0 : index
    %c0_0 = arith.constant 0 : index
    %0 = vector.load %arg2[%c0, %c0_0] : memref<1024x256xbf16, #tpu.memory_space<vmem>>, vector<1024x256xbf16>
    %c0_1 = arith.constant 0 : index
    %c0_2 = arith.constant 0 : index
    %1 = vector.load %arg1[%c0_1, %c0_2] : memref<256x128xbf16, #tpu.memory_space<vmem>>, vector<256x128xbf16>
    %cst = arith.constant dense<0.000000e+00> : vector<1024x128xf32>
    %2 = tpu.matmul %0, %1, %cst {dimension_numbers = #tpu.dot_dimension_numbers<[1], [0], [0], [1], [0, 0, 1, 1], [], []>} : vector<1024x256xbf16>, vector<256x128xbf16>, vector<1024x128xf32> -> vector<1024x128xf32>
    %c0_3 = arith.constant 0 : index
    %c0_4 = arith.constant 0 : index
    %3 = vector.load %arg3[%c0_3, %c0_4] : memref<1024x1xf32, #tpu.memory_space<vmem>>, vector<1024x1xf32>
    %4 = vector.broadcast %3 : vector<1024x1xf32> to vector<1024x128xf32>
    %5 = arith.addf %2, %4 : vector<1024x128xf32>
    %cst_5 = arith.constant 0.000000e+00 : f32
    %6 = vector.broadcast %cst_5 : f32 to vector<1024x128xf32>
    %7 = arith.maximumf %5, %6 : vector<1024x128xf32>
    %c0_6 = arith.constant 0 : index
    %c0_7 = arith.constant 0 : index
    %8 = vector.load %arg4[%c0_6, %c0_7] : memref<4x1024xbf16, #tpu.memory_space<vmem>>, vector<4x1024xbf16>
    %9 = arith.truncf %7 : vector<1024x128xf32> to vector<1024x128xbf16>
    %cst_8 = arith.constant dense<0.000000e+00> : vector<4x128xf32>
    %10 = tpu.matmul %8, %9, %cst_8 {dimension_numbers = #tpu.dot_dimension_numbers<[1], [0], [0], [1], [0, 0, 1, 1], [], []>} : vector<4x1024xbf16>, vector<1024x128xbf16>, vector<4x128xf32> -> vector<4x128xf32>
    %c0_9 = arith.constant 0 : index
    %c0_10 = arith.constant 0 : index
    %11 = vector.load %arg5[%c0_9, %c0_10] : memref<4x1xf32, #tpu.memory_space<vmem>>, vector<4x1xf32>
    %12 = vector.broadcast %11 : vector<4x1xf32> to vector<4x128xf32>
    %13 = arith.addf %10, %12 : vector<4x128xf32>
    %c0_11 = arith.constant 0 : index
    %c0_12 = arith.constant 0 : index
    %14 = vector.load %arg6[%c0_11, %c0_12] : memref<4x128xf32, #tpu.memory_space<vmem>>, vector<4x128xf32>
    tpu.vector_store %arg6[%c0_11, %c0_12], %13 {strides = array<i32>} : memref<4x128xf32, #tpu.memory_space<vmem>>, vector<4x128xf32>,
    return
  }
  func.func @transform_0(%arg0: i32) -> (i32, i32) {
    %c0_i32 = arith.constant 0 : i32
    %c0_i32_0 = arith.constant 0 : i32
    return %c0_i32, %arg0 : i32, i32
  }
  func.func @transform_1(%arg0: i32) -> (i32, i32) {
    %c0_i32 = arith.constant 0 : i32
    %c0_i32_0 = arith.constant 0 : i32
    %c0_i32_1 = arith.constant 0 : i32
    return %c0_i32, %c0_i32_0 : i32, i32
  }
  func.func @transform_2(%arg0: i32) -> (i32, i32) {
    %c0_i32 = arith.constant 0 : i32
    %c0_i32_0 = arith.constant 0 : i32
    %c0_i32_1 = arith.constant 0 : i32
    return %c0_i32, %c0_i32_0 : i32, i32
  }
  func.func @transform_3(%arg0: i32) -> (i32, i32) {
    %c0_i32 = arith.constant 0 : i32
    %c0_i32_0 = arith.constant 0 : i32
    %c0_i32_1 = arith.constant 0 : i32
    return %c0_i32, %c0_i32_0 : i32, i32
  }
  func.func @transform_4(%arg0: i32) -> (i32, i32) {
    %c0_i32 = arith.constant 0 : i32
    %c0_i32_0 = arith.constant 0 : i32
    %c0_i32_1 = arith.constant 0 : i32
    return %c0_i32, %c0_i32_0 : i32, i32
  }
  func.func @transform_5(%arg0: i32) -> (i32, i32) {
    %c0_i32 = arith.constant 0 : i32
    %c0_i32_0 = arith.constant 0 : i32
    return %c0_i32, %arg0 : i32, i32
  }
}

</mosaic_0001>

<llo_original>
// kernel: tpu_custom_call.1
$region0: #{tpu_custom_call.1}
  #allocation0 [shape = 'u32[]', space=smem, size = 0x4, offset = 0x4, fixed_abs, tag = 'smem constant byte address 0x4 - core index']
  #allocation1 [shape = 'u32[144,128]{1,0:T(1,128)}', space=vmem, size = 0x12000, scoped, tag = 'internal scratch']
  %s0 = inlined_call_operand.hbm [shape: bf16[256,128], index: 0, kind: input, shape index: {}]
  %s1 = inlined_call_operand.vmem [shape: bf16[1024,256], index: 1, kind: input, shape index: {}]
  %s2 = inlined_call_operand.vmem [shape: f32[1024,1], index: 2, kind: input, shape index: {}]
  %s3 = inlined_call_operand.vmem [shape: bf16[4,1024], index: 3, kind: input, shape index: {}]
  %s4 = inlined_call_operand.vmem [shape: f32[4,1], index: 4, kind: input, shape index: {}]
  %s5 = inlined_call_operand.hbm [shape: f32[4,128], index: 5, kind: output, shape index: {}]
  %s6 = sld [smem:[#allocation0]]
  $region34: #{tpu_custom_call.1} parent=0
    _
  %s8 = ssub.s32 1, %s6
  %s9 = scalar_select 0, %s8, %s6
  $region1: #{tpu_custom_call.1} parent=0
    #allocation2 [shape = 'u8[65536]{0}', space=vmem, size = 0x10000, scoped, tag = 'input window, operand 0, single buffered']
    #allocation3 [shape = 's32[1]{0}', space=sflag, size = 0x4, scoped, tag = 'scoped memory for tpu_custom_call.1']
    #allocation4 [shape = 's32[1]{0}', space=sflag, size = 0x4, scoped, tag = 'scoped memory for tpu_custom_call.1']
    #allocation5 [shape = 'u8[2048]{0}', space=vmem, size = 0x800, scoped, tag = 'output window, operand 0, single buffered']
    %10 = vsyncpa [#allocation3], 0
    %11 = vsyncpa [#allocation4], 0
    // Predicated region
    $region2: #{tpu_custom_call.1} parent=1 // pred_check
      _
    $region3: #{tpu_custom_call.1} parent=1 // pred_check_branch
      %13 = sbr.rel (0) target = $region5
    $region4: #{tpu_custom_call.1} parent=1 // pred_region
      %s15 = ssub.s32 2048, 2048
      %16 = vsyncadd [#allocation3], %s15
      %s17 = sshll.u32 [#allocation2], 4
      %s18 = int_to_ptr.vmem [resolvable:$true] %s17
      %23 = dma.hbm_to_vmem [thread:$0]  %s0, 2048, %s18, [#allocation3], 64, 64, 4
    $region5: #{tpu_custom_call.1} parent=1 // pred_fallthru
      _
    // Predicated region
    $region6: #{tpu_custom_call.1} parent=1 // pred_check
      _
    $region7: #{tpu_custom_call.1} parent=1 // pred_check_branch
      %25 = sbr.rel (0) target = $region9
    $region8: #{tpu_custom_call.1} parent=1 // pred_region
      _
    $region9: #{tpu_custom_call.1} parent=1 // pred_fallthru
      _
    // Predicated region
    $region10: #{tpu_custom_call.1} parent=1 // pred_check
      _
    $region11: #{tpu_custom_call.1} parent=1 // pred_check_branch
      %27 = sbr.rel (0) target = $region13
    $region12: #{tpu_custom_call.1} parent=1 // pred_region
      _
    $region13: #{tpu_custom_call.1} parent=1 // pred_fallthru
      _
    // Predicated region
    $region14: #{tpu_custom_call.1} parent=1 // pred_check
      _
    $region15: #{tpu_custom_call.1} parent=1 // pred_check_branch
      %29 = sbr.rel (0) target = $region17
    $region16: #{tpu_custom_call.1} parent=1 // pred_region
      _
    $region17: #{tpu_custom_call.1} parent=1 // pred_fallthru
      _
    // Predicated region
    $region18: #{tpu_custom_call.1} parent=1 // pred_check
      _
    $region19: #{tpu_custom_call.1} parent=1 // pred_check_branch
      %31 = sbr.rel (0) target = $region21
    $region20: #{tpu_custom_call.1} parent=1 // pred_region
      _
    $region21: #{tpu_custom_call.1} parent=1 // pred_fallthru
      _
    // Predicated region
    $region22: #{tpu_custom_call.1} parent=1 // pred_check
      _
    $region23: #{tpu_custom_call.1} parent=1 // pred_check_branch
      %33 = sbr.rel (0) target = $region25
    $region24: #{tpu_custom_call.1} parent=1 // pred_region
      %34 = dma.done [#allocation3], 2048
    $region25: #{tpu_custom_call.1} parent=1 // pred_fallthru
      _
    %v36 = vld [vmem:[%s1] sm:$0xff]
    %v37 = vld [vmem:[%s1 + $0x8] sm:$0xff]
    %v38 = vld [vmem:[%s1 + $0x10] sm:$0xff]
    %v39 = vld [vmem:[%s1 + $0x18] sm:$0xff]
    %v40 = vld [vmem:[%s1 + $0x20] sm:$0xff]
    %v41 = vld [vmem:[%s1 + $0x28] sm:$0xff]
    %v42 = vld [vmem:[%s1 + $0x30] sm:$0xff]
    %v43 = vld [vmem:[%s1 + $0x38] sm:$0xff]
    %v44 = vld [vmem:[%s1 + $0x40] sm:$0xff]
    %v45 = vld [vmem:[%s1 + $0x48] sm:$0xff]
    %v46 = vld [vmem:[%s1 + $0x50] sm:$0xff]
    %v47 = vld [vmem:[%s1 + $0x58] sm:$0xff]
    %v48 = vld [vmem:[%s1 + $0x60] sm:$0xff]
    %v49 = vld [vmem:[%s1 + $0x68] sm:$0xff]
    %v50 = vld [vmem:[%s1 + $0x70] sm:$0xff]
    %v51 = vld [vmem:[%s1 + $0x78] sm:$0xff]
    %v52 = vld [vmem:[%s1 + $0x80] sm:$0xff]
    %v53 = vld [vmem:[%s1 + $0x88] sm:$0xff]
    %v54 = vld [vmem:[%s1 + $0x90] sm:$0xff]
    %v55 = vld [vmem:[%s1 + $0x98] sm:$0xff]
    %v56 = vld [vmem:[%s1 + $0xa0] sm:$0xff]
    %v57 = vld [vmem:[%s1 + $0xa8] sm:$0xff]
    %v58 = vld [vmem:[%s1 + $0xb0] sm:$0xff]
    %v59 = vld [vmem:[%s1 + $0xb8] sm:$0xff]
    %v60 = vld [vmem:[%s1 + $0xc0] sm:$0xff]
    %v61 = vld [vmem:[%s1 + $0xc8] sm:$0xff]
    %v62 = vld [vmem:[%s1 + $0xd0] sm:$0xff]
    %v63 = vld [vmem:[%s1 + $0xd8] sm:$0xff]
    %v64 = vld [vmem:[%s1 + $0xe0] sm:$0xff]
    %v65 = vld [vmem:[%s1 + $0xe8] sm:$0xff]
    %v66 = vld [vmem:[%s1 + $0xf0] sm:$0xff]
    %v67 = vld [vmem:[%s1 + $0xf8] sm:$0xff]
    %v68 = vld [vmem:[%s1 + $0x100] sm:$0xff]
    %v69 = vld [vmem:[%s1 + $0x108] sm:$0xff]
    %v70 = vld [vmem:[%s1 + $0x110] sm:$0xff]
    %v71 = vld [vmem:[%s1 + $0x118] sm:$0xff]
    %v72 = vld [vmem:[%s1 + $0x120] sm:$0xff]
    %v73 = vld [vmem:[%s1 + $0x128] sm:$0xff]
    %v74 = vld [vmem:[%s1 + $0x130] sm:$0xff]
    %v75 = vld [vmem:[%s1 + $0x138] sm:$0xff]
    %v76 = vld [vmem:[%s1 + $0x140] sm:$0xff]
    %v77 = vld [vmem:[%s1 + $0x148] sm:$0xff]
    %v78 = vld [vmem:[%s1 + $0x150] sm:$0xff]
    %v79 = vld [vmem:[%s1 + $0x158] sm:$0xff]
    %v80 = vld [vmem:[%s1 + $0x160] sm:$0xff]
    %v81 = vld [vmem:[%s1 + $0x168] sm:$0xff]
    %v82 = vld [vmem:[%s1 + $0x170] sm:$0xff]
    %v83 = vld [vmem:[%s1 + $0x178] sm:$0xff]
    %v84 = vld [vmem:[%s1 + $0x180] sm:$0xff]
    %v85 = vld [vmem:[%s1 + $0x188] sm:$0xff]
    %v86 = vld [vmem:[%s1 + $0x190] sm:$0xff]
    %v87 = vld [vmem:[%s1 + $0x198] sm:$0xff]
    %v88 = vld [vmem:[%s1 + $0x1a0] sm:$0xff]
    %v89 = vld [vmem:[%s1 + $0x1a8] sm:$0xff]
    %v90 = vld [vmem:[%s1 + $0x1b0] sm:$0xff]
    %v91 = vld [vmem:[%s1 + $0x1b8] sm:$0xff]
    %v92 = vld [vmem:[%s1 + $0x1c0] sm:$0xff]
    %v93 = vld [vmem:[%s1 + $0x1c8] sm:$0xff]
    %v94 = vld [vmem:[%s1 + $0x1d0] sm:$0xff]
    %v95 = vld [vmem:[%s1 + $0x1d8] sm:$0xff]
    %v96 = vld [vmem:[%s1 + $0x1e0] sm:$0xff]
    %v97 = vld [vmem:[%s1 + $0x1e8] sm:$0xff]
    %v98 = vld [vmem:[%s1 + $0x1f0] sm:$0xff]
    %v99 = vld [vmem:[%s1 + $0x1f8] sm:$0xff]
    %v100 = vld [vmem:[%s1 + $0x200] sm:$0xff]
    %v101 = vld [vmem:[%s1 + $0x208] sm:$0xff]
    %v102 = vld [vmem:[%s1 + $0x210] sm:$0xff]
    %v103 = vld [vmem:[%s1 + $0x218] sm:$0xff]
    %v104 = vld [vmem:[%s1 + $0x220] sm:$0xff]
    %v105 = vld [vmem:[%s1 + $0x228] sm:$0xff]
    %v106 = vld [vmem:[%s1 + $0x230] sm:$0xff]
    %v107 = vld [vmem:[%s1 + $0x238] sm:$0xff]
    %v108 = vld [vmem:[%s1 + $0x240] sm:$0xff]
    %v109 = vld [vmem:[%s1 + $0x248] sm:$0xff]
    %v110 = vld [vmem:[%s1 + $0x250] sm:$0xff]
    %v111 = vld [vmem:[%s1 + $0x258] sm:$0xff]
    %v112 = vld [vmem:[%s1 + $0x260] sm:$0xff]
    %v113 = vld [vmem:[%s1 + $0x268] sm:$0xff]
    %v114 = vld [vmem:[%s1 + $0x270] sm:$0xff]
    %v115 = vld [vmem:[%s1 + $0x278] sm:$0xff]
    %v116 = vld [vmem:[%s1 + $0x280] sm:$0xff]
    %v117 = vld [vmem:[%s1 + $0x288] sm:$0xff]
    %v118 = vld [vmem:[%s1 + $0x290] sm:$0xff]
    %v119 = vld [vmem:[%s1 + $0x298] sm:$0xff]
    %v120 = vld [vmem:[%s1 + $0x2a0] sm:$0xff]
    %v121 = vld [vmem:[%s1 + $0x2a8] sm:$0xff]
    %v122 = vld [vmem:[%s1 + $0x2b0] sm:$0xff]
    %v123 = vld [vmem:[%s1 + $0x2b8] sm:$0xff]
    %v124 = vld [vmem:[%s1 + $0x2c0] sm:$0xff]
    %v125 = vld [vmem:[%s1 + $0x2c8] sm:$0xff]
    %v126 = vld [vmem:[%s1 + $0x2d0] sm:$0xff]
    %v127 = vld [vmem:[%s1 + $0x2d8] sm:$0xff]
    %v128 = vld [vmem:[%s1 + $0x2e0] sm:$0xff]
    %v129 = vld [vmem:[%s1 + $0x2e8] sm:$0xff]
    %v130 = vld [vmem:[%s1 + $0x2f0] sm:$0xff]
    %v131 = vld [vmem:[%s1 + $0x2f8] sm:$0xff]
    %v132 = vld [vmem:[%s1 + $0x300] sm:$0xff]
    %v133 = vld [vmem:[%s1 + $0x308] sm:$0xff]
    %v134 = vld [vmem:[%s1 + $0x310] sm:$0xff]
    %v135 = vld [vmem:[%s1 + $0x318] sm:$0xff]
    %v136 = vld [vmem:[%s1 + $0x320] sm:$0xff]
    %v137 = vld [vmem:[%s1 + $0x328] sm:$0xff]
    %v138 = vld [vmem:[%s1 + $0x330] sm:$0xff]
    %v139 = vld [vmem:[%s1 + $0x338] sm:$0xff]
    %v140 = vld [vmem:[%s1 + $0x340] sm:$0xff]
    %v141 = vld [vmem:[%s1 + $0x348] sm:$0xff]
    %v142 = vld [vmem:[%s1 + $0x350] sm:$0xff]
    %v143 = vld [vmem:[%s1 + $0x358] sm:$0xff]
    %v144 = vld [vmem:[%s1 + $0x360] sm:$0xff]
    %v145 = vld [vmem:[%s1 + $0x368] sm:$0xff]
    %v146 = vld [vmem:[%s1 + $0x370] sm:$0xff]
    %v147 = vld [vmem:[%s1 + $0x378] sm:$0xff]
    %v148 = vld [vmem:[%s1 + $0x380] sm:$0xff]
    %v149 = vld [vmem:[%s1 + $0x388] sm:$0xff]
    %v150 = vld [vmem:[%s1 + $0x390] sm:$0xff]
    %v151 = vld [vmem:[%s1 + $0x398] sm:$0xff]
    %v152 = vld [vmem:[%s1 + $0x3a0] sm:$0xff]
    %v153 = vld [vmem:[%s1 + $0x3a8] sm:$0xff]
    %v154 = vld [vmem:[%s1 + $0x3b0] sm:$0xff]
    %v155 = vld [vmem:[%s1 + $0x3b8] sm:$0xff]
    %v156 = vld [vmem:[%s1 + $0x3c0] sm:$0xff]
    %v157 = vld [vmem:[%s1 + $0x3c8] sm:$0xff]
    %v158 = vld [vmem:[%s1 + $0x3d0] sm:$0xff]
    %v159 = vld [vmem:[%s1 + $0x3d8] sm:$0xff]
    %v160 = vld [vmem:[%s1 + $0x3e0] sm:$0xff]
    %v161 = vld [vmem:[%s1 + $0x3e8] sm:$0xff]
    %v162 = vld [vmem:[%s1 + $0x3f0] sm:$0xff]
    %v163 = vld [vmem:[%s1 + $0x3f8] sm:$0xff]
    %v164 = vld [vmem:[#allocation2] sm:$0xf]
    %v165 = vld [vmem:[#allocation2 + $0x4] sm:$0xf]
    %v166 = vld [vmem:[#allocation2 + $0x8] sm:$0xf]
    %v167 = vld [vmem:[#allocation2 + $0xc] sm:$0xf]
    %v168 = vld [vmem:[#allocation2 + $0x10] sm:$0xf]
    %v169 = vld [vmem:[#allocation2 + $0x14] sm:$0xf]
    %v170 = vld [vmem:[#allocation2 + $0x18] sm:$0xf]
    %v171 = vld [vmem:[#allocation2 + $0x1c] sm:$0xf]
    %v172 = vld [vmem:[#allocation2 + $0x20] sm:$0xf]
    %v173 = vld [vmem:[#allocation2 + $0x24] sm:$0xf]
    %v174 = vld [vmem:[#allocation2 + $0x28] sm:$0xf]
    %v175 = vld [vmem:[#allocation2 + $0x2c] sm:$0xf]
    %v176 = vld [vmem:[#allocation2 + $0x30] sm:$0xf]
    %v177 = vld [vmem:[#allocation2 + $0x34] sm:$0xf]
    %v178 = vld [vmem:[#allocation2 + $0x38] sm:$0xf]
    %v179 = vld [vmem:[#allocation2 + $0x3c] sm:$0xf]
    %v180 = vld [vmem:[#allocation2 + $0x40] sm:$0xf]
    %v181 = vld [vmem:[#allocation2 + $0x44] sm:$0xf]
    %v182 = vld [vmem:[#allocation2 + $0x48] sm:$0xf]
    %v183 = vld [vmem:[#allocation2 + $0x4c] sm:$0xf]
    %v184 = vld [vmem:[#allocation2 + $0x50] sm:$0xf]
    %v185 = vld [vmem:[#allocation2 + $0x54] sm:$0xf]
    %v186 = vld [vmem:[#allocation2 + $0x58] sm:$0xf]
    %v187 = vld [vmem:[#allocation2 + $0x5c] sm:$0xf]
    %v188 = vld [vmem:[#allocation2 + $0x60] sm:$0xf]
    %v189 = vld [vmem:[#allocation2 + $0x64] sm:$0xf]
    %v190 = vld [vmem:[#allocation2 + $0x68] sm:$0xf]
    %v191 = vld [vmem:[#allocation2 + $0x6c] sm:$0xf]
    %v192 = vld [vmem:[#allocation2 + $0x70] sm:$0xf]
    %v193 = vld [vmem:[#allocation2 + $0x74] sm:$0xf]
    %v194 = vld [vmem:[#allocation2 + $0x78] sm:$0xf]
    %v195 = vld [vmem:[#allocation2 + $0x7c] sm:$0xf]
    %v196 = vld [vmem:[%s2] sm:$0xff]
    %v197 = vld [vmem:[%s2 + $0x8] sm:$0xff]
    %v198 = vld [vmem:[%s2 + $0x10] sm:$0xff]
    %v199 = vld [vmem:[%s2 + $0x18] sm:$0xff]
    %v200 = vld [vmem:[%s2 + $0x20] sm:$0xff]
    %v201 = vld [vmem:[%s2 + $0x28] sm:$0xff]
    %v202 = vld [vmem:[%s2 + $0x30] sm:$0xff]
    %v203 = vld [vmem:[%s2 + $0x38] sm:$0xff]
    %v204 = vld [vmem:[%s2 + $0x40] sm:$0xff]
    %v205 = vld [vmem:[%s2 + $0x48] sm:$0xff]
    %v206 = vld [vmem:[%s2 + $0x50] sm:$0xff]
    %v207 = vld [vmem:[%s2 + $0x58] sm:$0xff]
    %v208 = vld [vmem:[%s2 + $0x60] sm:$0xff]
    %v209 = vld [vmem:[%s2 + $0x68] sm:$0xff]
    %v210 = vld [vmem:[%s2 + $0x70] sm:$0xff]
    %v211 = vld [vmem:[%s2 + $0x78] sm:$0xff]
    %v212 = vld [vmem:[%s2 + $0x80] sm:$0xff]
    %v213 = vld [vmem:[%s2 + $0x88] sm:$0xff]
    %v214 = vld [vmem:[%s2 + $0x90] sm:$0xff]
    %v215 = vld [vmem:[%s2 + $0x98] sm:$0xff]
    %v216 = vld [vmem:[%s2 + $0xa0] sm:$0xff]
    %v217 = vld [vmem:[%s2 + $0xa8] sm:$0xff]
    %v218 = vld [vmem:[%s2 + $0xb0] sm:$0xff]
    %v219 = vld [vmem:[%s2 + $0xb8] sm:$0xff]
    %v220 = vld [vmem:[%s2 + $0xc0] sm:$0xff]
    %v221 = vld [vmem:[%s2 + $0xc8] sm:$0xff]
    %v222 = vld [vmem:[%s2 + $0xd0] sm:$0xff]
    %v223 = vld [vmem:[%s2 + $0xd8] sm:$0xff]
    %v224 = vld [vmem:[%s2 + $0xe0] sm:$0xff]
    %v225 = vld [vmem:[%s2 + $0xe8] sm:$0xff]
    %v226 = vld [vmem:[%s2 + $0xf0] sm:$0xff]
    %v227 = vld [vmem:[%s2 + $0xf8] sm:$0xff]
    %v228 = vld [vmem:[%s2 + $0x100] sm:$0xff]
    %v229 = vld [vmem:[%s2 + $0x108] sm:$0xff]
    %v230 = vld [vmem:[%s2 + $0x110] sm:$0xff]
    %v231 = vld [vmem:[%s2 + $0x118] sm:$0xff]
    %v232 = vld [vmem:[%s2 + $0x120] sm:$0xff]
    %v233 = vld [vmem:[%s2 + $0x128] sm:$0xff]
    %v234 = vld [vmem:[%s2 + $0x130] sm:$0xff]
    %v235 = vld [vmem:[%s2 + $0x138] sm:$0xff]
    %v236 = vld [vmem:[%s2 + $0x140] sm:$0xff]
    %v237 = vld [vmem:[%s2 + $0x148] sm:$0xff]
    %v238 = vld [vmem:[%s2 + $0x150] sm:$0xff]
    %v239 = vld [vmem:[%s2 + $0x158] sm:$0xff]
    %v240 = vld [vmem:[%s2 + $0x160] sm:$0xff]
    %v241 = vld [vmem:[%s2 + $0x168] sm:$0xff]
    %v242 = vld [vmem:[%s2 + $0x170] sm:$0xff]
    %v243 = vld [vmem:[%s2 + $0x178] sm:$0xff]
    %v244 = vld [vmem:[%s2 + $0x180] sm:$0xff]
    %v245 = vld [vmem:[%s2 + $0x188] sm:$0xff]
    %v246 = vld [vmem:[%s2 + $0x190] sm:$0xff]
    %v247 = vld [vmem:[%s2 + $0x198] sm:$0xff]
    %v248 = vld [vmem:[%s2 + $0x1a0] sm:$0xff]
    %v249 = vld [vmem:[%s2 + $0x1a8] sm:$0xff]
    %v250 = vld [vmem:[%s2 + $0x1b0] sm:$0xff]
    %v251 = vld [vmem:[%s2 + $0x1b8] sm:$0xff]
    %v252 = vld [vmem:[%s2 + $0x1c0] sm:$0xff]
    %v253 = vld [vmem:[%s2 + $0x1c8] sm:$0xff]
    %v254 = vld [vmem:[%s2 + $0x1d0] sm:$0xff]
    %v255 = vld [vmem:[%s2 + $0x1d8] sm:$0xff]
    %v256 = vld [vmem:[%s2 + $0x1e0] sm:$0xff]
    %v257 = vld [vmem:[%s2 + $0x1e8] sm:$0xff]
    %v258 = vld [vmem:[%s2 + $0x1f0] sm:$0xff]
    %v259 = vld [vmem:[%s2 + $0x1f8] sm:$0xff]
    %v260 = vld [vmem:[%s2 + $0x200] sm:$0xff]
    %v261 = vld [vmem:[%s2 + $0x208] sm:$0xff]
    %v262 = vld [vmem:[%s2 + $0x210] sm:$0xff]
    %v263 = vld [vmem:[%s2 + $0x218] sm:$0xff]
    %v264 = vld [vmem:[%s2 + $0x220] sm:$0xff]
    %v265 = vld [vmem:[%s2 + $0x228] sm:$0xff]
    %v266 = vld [vmem:[%s2 + $0x230] sm:$0xff]
    %v267 = vld [vmem:[%s2 + $0x238] sm:$0xff]
    %v268 = vld [vmem:[%s2 + $0x240] sm:$0xff]
    %v269 = vld [vmem:[%s2 + $0x248] sm:$0xff]
    %v270 = vld [vmem:[%s2 + $0x250] sm:$0xff]
    %v271 = vld [vmem:[%s2 + $0x258] sm:$0xff]
    %v272 = vld [vmem:[%s2 + $0x260] sm:$0xff]
    %v273 = vld [vmem:[%s2 + $0x268] sm:$0xff]
    %v274 = vld [vmem:[%s2 + $0x270] sm:$0xff]
    %v275 = vld [vmem:[%s2 + $0x278] sm:$0xff]
    %v276 = vld [vmem:[%s2 + $0x280] sm:$0xff]
    %v277 = vld [vmem:[%s2 + $0x288] sm:$0xff]
    %v278 = vld [vmem:[%s2 + $0x290] sm:$0xff]
    %v279 = vld [vmem:[%s2 + $0x298] sm:$0xff]
    %v280 = vld [vmem:[%s2 + $0x2a0] sm:$0xff]
    %v281 = vld [vmem:[%s2 + $0x2a8] sm:$0xff]
    %v282 = vld [vmem:[%s2 + $0x2b0] sm:$0xff]
    %v283 = vld [vmem:[%s2 + $0x2b8] sm:$0xff]
    %v284 = vld [vmem:[%s2 + $0x2c0] sm:$0xff]
    %v285 = vld [vmem:[%s2 + $0x2c8] sm:$0xff]
    %v286 = vld [vmem:[%s2 + $0x2d0] sm:$0xff]
    %v287 = vld [vmem:[%s2 + $0x2d8] sm:$0xff]
    %v288 = vld [vmem:[%s2 + $0x2e0] sm:$0xff]
    %v289 = vld [vmem:[%s2 + $0x2e8] sm:$0xff]
    %v290 = vld [vmem:[%s2 + $0x2f0] sm:$0xff]
    %v291 = vld [vmem:[%s2 + $0x2f8] sm:$0xff]
    %v292 = vld [vmem:[%s2 + $0x300] sm:$0xff]
    %v293 = vld [vmem:[%s2 + $0x308] sm:$0xff]
    %v294 = vld [vmem:[%s2 + $0x310] sm:$0xff]
    %v295 = vld [vmem:[%s2 + $0x318] sm:$0xff]
    %v296 = vld [vmem:[%s2 + $0x320] sm:$0xff]
    %v297 = vld [vmem:[%s2 + $0x328] sm:$0xff]
    %v298 = vld [vmem:[%s2 + $0x330] sm:$0xff]
    %v299 = vld [vmem:[%s2 + $0x338] sm:$0xff]
    %v300 = vld [vmem:[%s2 + $0x340] sm:$0xff]
    %v301 = vld [vmem:[%s2 + $0x348] sm:$0xff]
    %v302 = vld [vmem:[%s2 + $0x350] sm:$0xff]
    %v303 = vld [vmem:[%s2 + $0x358] sm:$0xff]
    %v304 = vld [vmem:[%s2 + $0x360] sm:$0xff]
    %v305 = vld [vmem:[%s2 + $0x368] sm:$0xff]
    %v306 = vld [vmem:[%s2 + $0x370] sm:$0xff]
    %v307 = vld [vmem:[%s2 + $0x378] sm:$0xff]
    %v308 = vld [vmem:[%s2 + $0x380] sm:$0xff]
    %v309 = vld [vmem:[%s2 + $0x388] sm:$0xff]
    %v310 = vld [vmem:[%s2 + $0x390] sm:$0xff]
    %v311 = vld [vmem:[%s2 + $0x398] sm:$0xff]
    %v312 = vld [vmem:[%s2 + $0x3a0] sm:$0xff]
    %v313 = vld [vmem:[%s2 + $0x3a8] sm:$0xff]
    %v314 = vld [vmem:[%s2 + $0x3b0] sm:$0xff]
    %v315 = vld [vmem:[%s2 + $0x3b8] sm:$0xff]
    %v316 = vld [vmem:[%s2 + $0x3c0] sm:$0xff]
    %v317 = vld [vmem:[%s2 + $0x3c8] sm:$0xff]
    %v318 = vld [vmem:[%s2 + $0x3d0] sm:$0xff]
    %v319 = vld [vmem:[%s2 + $0x3d8] sm:$0xff]
    %v320 = vld [vmem:[%s2 + $0x3e0] sm:$0xff]
    %v321 = vld [vmem:[%s2 + $0x3e8] sm:$0xff]
    %v322 = vld [vmem:[%s2 + $0x3f0] sm:$0xff]
    %v323 = vld [vmem:[%s2 + $0x3f8] sm:$0xff]
    %325 = vset.pattern.permute.xlu0 0
    %326 = vperm.xlu0 %325, %v196
    %v327 = vpop.permute.xlu0 %326
    %330 = vset.pattern.permute.xlu0 0
    %331 = vperm.xlu0 %330, %v197
    %v332 = vpop.permute.xlu0 %331
    %335 = vset.pattern.permute.xlu0 0
    %336 = vperm.xlu0 %335, %v198
    %v337 = vpop.permute.xlu0 %336
    %340 = vset.pattern.permute.xlu0 0
    %341 = vperm.xlu0 %340, %v199
    %v342 = vpop.permute.xlu0 %341
    %345 = vset.pattern.permute.xlu0 0
    %346 = vperm.xlu0 %345, %v200
    %v347 = vpop.permute.xlu0 %346
    %350 = vset.pattern.permute.xlu0 0
    %351 = vperm.xlu0 %350, %v201
    %v352 = vpop.permute.xlu0 %351
    %355 = vset.pattern.permute.xlu0 0
    %356 = vperm.xlu0 %355, %v202
    %v357 = vpop.permute.xlu0 %356
    %360 = vset.pattern.permute.xlu0 0
    %361 = vperm.xlu0 %360, %v203
    %v362 = vpop.permute.xlu0 %361
    %365 = vset.pattern.permute.xlu0 0
    %366 = vperm.xlu0 %365, %v204
    %v367 = vpop.permute.xlu0 %366
    %370 = vset.pattern.permute.xlu0 0
    %371 = vperm.xlu0 %370, %v205
    %v372 = vpop.permute.xlu0 %371
    %375 = vset.pattern.permute.xlu0 0
    %376 = vperm.xlu0 %375, %v206
    %v377 = vpop.permute.xlu0 %376
    %380 = vset.pattern.permute.xlu0 0
    %381 = vperm.xlu0 %380, %v207
    %v382 = vpop.permute.xlu0 %381
    %385 = vset.pattern.permute.xlu0 0
    %386 = vperm.xlu0 %385, %v208
    %v387 = vpop.permute.xlu0 %386
    %390 = vset.pattern.permute.xlu0 0
    %391 = vperm.xlu0 %390, %v209
    %v392 = vpop.permute.xlu0 %391
    %395 = vset.pattern.permute.xlu0 0
    %396 = vperm.xlu0 %395, %v210
    %v397 = vpop.permute.xlu0 %396
    %400 = vset.pattern.permute.xlu0 0
    %401 = vperm.xlu0 %400, %v211
    %v402 = vpop.permute.xlu0 %401
    %405 = vset.pattern.permute.xlu0 0
    %406 = vperm.xlu0 %405, %v212
    %v407 = vpop.permute.xlu0 %406
    %410 = vset.pattern.permute.xlu0 0
    %411 = vperm.xlu0 %410, %v213
    %v412 = vpop.permute.xlu0 %411
    %415 = vset.pattern.permute.xlu0 0
    %416 = vperm.xlu0 %415, %v214
    %v417 = vpop.permute.xlu0 %416
    %420 = vset.pattern.permute.xlu0 0
    %421 = vperm.xlu0 %420, %v215
    %v422 = vpop.permute.xlu0 %421
    %425 = vset.pattern.permute.xlu0 0
    %426 = vperm.xlu0 %425, %v216
    %v427 = vpop.permute.xlu0 %426
    %430 = vset.pattern.permute.xlu0 0
    %431 = vperm.xlu0 %430, %v217
    %v432 = vpop.permute.xlu0 %431
    %435 = vset.pattern.permute.xlu0 0
    %436 = vperm.xlu0 %435, %v218
    %v437 = vpop.permute.xlu0 %436
    %440 = vset.pattern.permute.xlu0 0
    %441 = vperm.xlu0 %440, %v219
    %v442 = vpop.permute.xlu0 %441
    %445 = vset.pattern.permute.xlu0 0
    %446 = vperm.xlu0 %445, %v220
    %v447 = vpop.permute.xlu0 %446
    %450 = vset.pattern.permute.xlu0 0
    %451 = vperm.xlu0 %450, %v221
    %v452 = vpop.permute.xlu0 %451
    %455 = vset.pattern.permute.xlu0 0
    %456 = vperm.xlu0 %455, %v222
    %v457 = vpop.permute.xlu0 %456
    %460 = vset.pattern.permute.xlu0 0
    %461 = vperm.xlu0 %460, %v223
    %v462 = vpop.permute.xlu0 %461
    %465 = vset.pattern.permute.xlu0 0
    %466 = vperm.xlu0 %465, %v224
    %v467 = vpop.permute.xlu0 %466
    %470 = vset.pattern.permute.xlu0 0
    %471 = vperm.xlu0 %470, %v225
    %v472 = vpop.permute.xlu0 %471
    %475 = vset.pattern.permute.xlu0 0
    %476 = vperm.xlu0 %475, %v226
    %v477 = vpop.permute.xlu0 %476
    %480 = vset.pattern.permute.xlu0 0
    %481 = vperm.xlu0 %480, %v227
    %v482 = vpop.permute.xlu0 %481
    %485 = vset.pattern.permute.xlu0 0
    %486 = vperm.xlu0 %485, %v228
    %v487 = vpop.permute.xlu0 %486
    %490 = vset.pattern.permute.xlu0 0
    %491 = vperm.xlu0 %490, %v229
    %v492 = vpop.permute.xlu0 %491
    %495 = vset.pattern.permute.xlu0 0
    %496 = vperm.xlu0 %495, %v230
    %v497 = vpop.permute.xlu0 %496
    %500 = vset.pattern.permute.xlu0 0
    %501 = vperm.xlu0 %500, %v231
    %v502 = vpop.permute.xlu0 %501
    %505 = vset.pattern.permute.xlu0 0
    %506 = vperm.xlu0 %505, %v232
    %v507 = vpop.permute.xlu0 %506
    %510 = vset.pattern.permute.xlu0 0
    %511 = vperm.xlu0 %510, %v233
    %v512 = vpop.permute.xlu0 %511
    %515 = vset.pattern.permute.xlu0 0
    %516 = vperm.xlu0 %515, %v234
    %v517 = vpop.permute.xlu0 %516
    %520 = vset.pattern.permute.xlu0 0
    %521 = vperm.xlu0 %520, %v235
    %v522 = vpop.permute.xlu0 %521
    %525 = vset.pattern.permute.xlu0 0
    %526 = vperm.xlu0 %525, %v236
    %v527 = vpop.permute.xlu0 %526
    %530 = vset.pattern.permute.xlu0 0
    %531 = vperm.xlu0 %530, %v237
    %v532 = vpop.permute.xlu0 %531
    %535 = vset.pattern.permute.xlu0 0
    %536 = vperm.xlu0 %535, %v238
    %v537 = vpop.permute.xlu0 %536
    %540 = vset.pattern.permute.xlu0 0
    %541 = vperm.xlu0 %540, %v239
    %v542 = vpop.permute.xlu0 %541
    %545 = vset.pattern.permute.xlu0 0
    %546 = vperm.xlu0 %545, %v240
    %v547 = vpop.permute.xlu0 %546
    %550 = vset.pattern.permute.xlu0 0
    %551 = vperm.xlu0 %550, %v241
    %v552 = vpop.permute.xlu0 %551
    %555 = vset.pattern.permute.xlu0 0
    %556 = vperm.xlu0 %555, %v242
    %v557 = vpop.permute.xlu0 %556
    %560 = vset.pattern.permute.xlu0 0
    %561 = vperm.xlu0 %560, %v243
    %v562 = vpop.permute.xlu0 %561
    %565 = vset.pattern.permute.xlu0 0
    %566 = vperm.xlu0 %565, %v244
    %v567 = vpop.permute.xlu0 %566
    %570 = vset.pattern.permute.xlu0 0
    %571 = vperm.xlu0 %570, %v245
    %v572 = vpop.permute.xlu0 %571
    %575 = vset.pattern.permute.xlu0 0
    %576 = vperm.xlu0 %575, %v246
    %v577 = vpop.permute.xlu0 %576
    %580 = vset.pattern.permute.xlu0 0
    %581 = vperm.xlu0 %580, %v247
    %v582 = vpop.permute.xlu0 %581
    %585 = vset.pattern.permute.xlu0 0
    %586 = vperm.xlu0 %585, %v248
    %v587 = vpop.permute.xlu0 %586
    %590 = vset.pattern.permute.xlu0 0
    %591 = vperm.xlu0 %590, %v249
    %v592 = vpop.permute.xlu0 %591
    %595 = vset.pattern.permute.xlu0 0
    %596 = vperm.xlu0 %595, %v250
    %v597 = vpop.permute.xlu0 %596
    %600 = vset.pattern.permute.xlu0 0
    %601 = vperm.xlu0 %600, %v251
    %v602 = vpop.permute.xlu0 %601
    %605 = vset.pattern.permute.xlu0 0
    %606 = vperm.xlu0 %605, %v252
    %v607 = vpop.permute.xlu0 %606
    %610 = vset.pattern.permute.xlu0 0
    %611 = vperm.xlu0 %610, %v253
    %v612 = vpop.permute.xlu0 %611
    %615 = vset.pattern.permute.xlu0 0
    %616 = vperm.xlu0 %615, %v254
    %v617 = vpop.permute.xlu0 %616
    %620 = vset.pattern.permute.xlu0 0
    %621 = vperm.xlu0 %620, %v255
    %v622 = vpop.permute.xlu0 %621
    %625 = vset.pattern.permute.xlu0 0
    %626 = vperm.xlu0 %625, %v256
    %v627 = vpop.permute.xlu0 %626
    %630 = vset.pattern.permute.xlu0 0
    %631 = vperm.xlu0 %630, %v257
    %v632 = vpop.permute.xlu0 %631
    %635 = vset.pattern.permute.xlu0 0
    %636 = vperm.xlu0 %635, %v258
    %v637 = vpop.permute.xlu0 %636
    %640 = vset.pattern.permute.xlu0 0
    %641 = vperm.xlu0 %640, %v259
    %v642 = vpop.permute.xlu0 %641
    %645 = vset.pattern.permute.xlu0 0
    %646 = vperm.xlu0 %645, %v260
    %v647 = vpop.permute.xlu0 %646
    %650 = vset.pattern.permute.xlu0 0
    %651 = vperm.xlu0 %650, %v261
    %v652 = vpop.permute.xlu0 %651
    %655 = vset.pattern.permute.xlu0 0
    %656 = vperm.xlu0 %655, %v262
    %v657 = vpop.permute.xlu0 %656
    %660 = vset.pattern.permute.xlu0 0
    %661 = vperm.xlu0 %660, %v263
    %v662 = vpop.permute.xlu0 %661
    %665 = vset.pattern.permute.xlu0 0
    %666 = vperm.xlu0 %665, %v264
    %v667 = vpop.permute.xlu0 %666
    %670 = vset.pattern.permute.xlu0 0
    %671 = vperm.xlu0 %670, %v265
    %v672 = vpop.permute.xlu0 %671
    %675 = vset.pattern.permute.xlu0 0
    %676 = vperm.xlu0 %675, %v266
    %v677 = vpop.permute.xlu0 %676
    %680 = vset.pattern.permute.xlu0 0
    %681 = vperm.xlu0 %680, %v267
    %v682 = vpop.permute.xlu0 %681
    %685 = vset.pattern.permute.xlu0 0
    %686 = vperm.xlu0 %685, %v268
    %v687 = vpop.permute.xlu0 %686
    %690 = vset.pattern.permute.xlu0 0
    %691 = vperm.xlu0 %690, %v269
    %v692 = vpop.permute.xlu0 %691
    %695 = vset.pattern.permute.xlu0 0
    %696 = vperm.xlu0 %695, %v270
    %v697 = vpop.permute.xlu0 %696
    %700 = vset.pattern.permute.xlu0 0
    %701 = vperm.xlu0 %700, %v271
    %v702 = vpop.permute.xlu0 %701
    %705 = vset.pattern.permute.xlu0 0
    %706 = vperm.xlu0 %705, %v272
    %v707 = vpop.permute.xlu0 %706
    %710 = vset.pattern.permute.xlu0 0
    %711 = vperm.xlu0 %710, %v273
    %v712 = vpop.permute.xlu0 %711
    %715 = vset.pattern.permute.xlu0 0
    %716 = vperm.xlu0 %715, %v274
    %v717 = vpop.permute.xlu0 %716
    %720 = vset.pattern.permute.xlu0 0
    %721 = vperm.xlu0 %720, %v275
    %v722 = vpop.permute.xlu0 %721
    %725 = vset.pattern.permute.xlu0 0
    %726 = vperm.xlu0 %725, %v276
    %v727 = vpop.permute.xlu0 %726
    %730 = vset.pattern.permute.xlu0 0
    %731 = vperm.xlu0 %730, %v277
    %v732 = vpop.permute.xlu0 %731
    %735 = vset.pattern.permute.xlu0 0
    %736 = vperm.xlu0 %735, %v278
    %v737 = vpop.permute.xlu0 %736
    %740 = vset.pattern.permute.xlu0 0
    %741 = vperm.xlu0 %740, %v279
    %v742 = vpop.permute.xlu0 %741
    %745 = vset.pattern.permute.xlu0 0
    %746 = vperm.xlu0 %745, %v280
    %v747 = vpop.permute.xlu0 %746
    %750 = vset.pattern.permute.xlu0 0
    %751 = vperm.xlu0 %750, %v281
    %v752 = vpop.permute.xlu0 %751
    %755 = vset.pattern.permute.xlu0 0
    %756 = vperm.xlu0 %755, %v282
    %v757 = vpop.permute.xlu0 %756
    %760 = vset.pattern.permute.xlu0 0
    %761 = vperm.xlu0 %760, %v283
    %v762 = vpop.permute.xlu0 %761
    %765 = vset.pattern.permute.xlu0 0
    %766 = vperm.xlu0 %765, %v284
    %v767 = vpop.permute.xlu0 %766
    %770 = vset.pattern.permute.xlu0 0
    %771 = vperm.xlu0 %770, %v285
    %v772 = vpop.permute.xlu0 %771
    %775 = vset.pattern.permute.xlu0 0
    %776 = vperm.xlu0 %775, %v286
    %v777 = vpop.permute.xlu0 %776
    %780 = vset.pattern.permute.xlu0 0
    %781 = vperm.xlu0 %780, %v287
    %v782 = vpop.permute.xlu0 %781
    %785 = vset.pattern.permute.xlu0 0
    %786 = vperm.xlu0 %785, %v288
    %v787 = vpop.permute.xlu0 %786
    %790 = vset.pattern.permute.xlu0 0
    %791 = vperm.xlu0 %790, %v289
    %v792 = vpop.permute.xlu0 %791
    %795 = vset.pattern.permute.xlu0 0
    %796 = vperm.xlu0 %795, %v290
    %v797 = vpop.permute.xlu0 %796
    %800 = vset.pattern.permute.xlu0 0
    %801 = vperm.xlu0 %800, %v291
    %v802 = vpop.permute.xlu0 %801
    %805 = vset.pattern.permute.xlu0 0
    %806 = vperm.xlu0 %805, %v292
    %v807 = vpop.permute.xlu0 %806
    %810 = vset.pattern.permute.xlu0 0
    %811 = vperm.xlu0 %810, %v293
    %v812 = vpop.permute.xlu0 %811
    %815 = vset.pattern.permute.xlu0 0
    %816 = vperm.xlu0 %815, %v294
    %v817 = vpop.permute.xlu0 %816
    %820 = vset.pattern.permute.xlu0 0
    %821 = vperm.xlu0 %820, %v295
    %v822 = vpop.permute.xlu0 %821
    %825 = vset.pattern.permute.xlu0 0
    %826 = vperm.xlu0 %825, %v296
    %v827 = vpop.permute.xlu0 %826
    %830 = vset.pattern.permute.xlu0 0
    %831 = vperm.xlu0 %830, %v297
    %v832 = vpop.permute.xlu0 %831
    %835 = vset.pattern.permute.xlu0 0
    %836 = vperm.xlu0 %835, %v298
    %v837 = vpop.permute.xlu0 %836
    %840 = vset.pattern.permute.xlu0 0
    %841 = vperm.xlu0 %840, %v299
    %v842 = vpop.permute.xlu0 %841
    %845 = vset.pattern.permute.xlu0 0
    %846 = vperm.xlu0 %845, %v300
    %v847 = vpop.permute.xlu0 %846
    %850 = vset.pattern.permute.xlu0 0
    %851 = vperm.xlu0 %850, %v301
    %v852 = vpop.permute.xlu0 %851
    %855 = vset.pattern.permute.xlu0 0
    %856 = vperm.xlu0 %855, %v302
    %v857 = vpop.permute.xlu0 %856
    %860 = vset.pattern.permute.xlu0 0
    %861 = vperm.xlu0 %860, %v303
    %v862 = vpop.permute.xlu0 %861
    %865 = vset.pattern.permute.xlu0 0
    %866 = vperm.xlu0 %865, %v304
    %v867 = vpop.permute.xlu0 %866
    %870 = vset.pattern.permute.xlu0 0
    %871 = vperm.xlu0 %870, %v305
    %v872 = vpop.permute.xlu0 %871
    %875 = vset.pattern.permute.xlu0 0
    %876 = vperm.xlu0 %875, %v306
    %v877 = vpop.permute.xlu0 %876
    %880 = vset.pattern.permute.xlu0 0
    %881 = vperm.xlu0 %880, %v307
    %v882 = vpop.permute.xlu0 %881
    %885 = vset.pattern.permute.xlu0 0
    %886 = vperm.xlu0 %885, %v308
    %v887 = vpop.permute.xlu0 %886
    %890 = vset.pattern.permute.xlu0 0
    %891 = vperm.xlu0 %890, %v309
    %v892 = vpop.permute.xlu0 %891
    %895 = vset.pattern.permute.xlu0 0
    %896 = vperm.xlu0 %895, %v310
    %v897 = vpop.permute.xlu0 %896
    %900 = vset.pattern.permute.xlu0 0
    %901 = vperm.xlu0 %900, %v311
    %v902 = vpop.permute.xlu0 %901
    %905 = vset.pattern.permute.xlu0 0
    %906 = vperm.xlu0 %905, %v312
    %v907 = vpop.permute.xlu0 %906
    %910 = vset.pattern.permute.xlu0 0
    %911 = vperm.xlu0 %910, %v313
    %v912 = vpop.permute.xlu0 %911
    %915 = vset.pattern.permute.xlu0 0
    %916 = vperm.xlu0 %915, %v314
    %v917 = vpop.permute.xlu0 %916
    %920 = vset.pattern.permute.xlu0 0
    %921 = vperm.xlu0 %920, %v315
    %v922 = vpop.permute.xlu0 %921
    %925 = vset.pattern.permute.xlu0 0
    %926 = vperm.xlu0 %925, %v316
    %v927 = vpop.permute.xlu0 %926
    %930 = vset.pattern.permute.xlu0 0
    %931 = vperm.xlu0 %930, %v317
    %v932 = vpop.permute.xlu0 %931
    %935 = vset.pattern.permute.xlu0 0
    %936 = vperm.xlu0 %935, %v318
    %v937 = vpop.permute.xlu0 %936
    %940 = vset.pattern.permute.xlu0 0
    %941 = vperm.xlu0 %940, %v319
    %v942 = vpop.permute.xlu0 %941
    %945 = vset.pattern.permute.xlu0 0
    %946 = vperm.xlu0 %945, %v320
    %v947 = vpop.permute.xlu0 %946
    %950 = vset.pattern.permute.xlu0 0
    %951 = vperm.xlu0 %950, %v321
    %v952 = vpop.permute.xlu0 %951
    %955 = vset.pattern.permute.xlu0 0
    %956 = vperm.xlu0 %955, %v322
    %v957 = vpop.permute.xlu0 %956
    %960 = vset.pattern.permute.xlu0 0
    %961 = vperm.xlu0 %960, %v323
    %v962 = vpop.permute.xlu0 %961
    %v1092 = vunpack.c.l.b16 %v36
    %v1093 = vunpack.c.h.b16 %v36
    %v1094 = vunpack.c.l.b16 %v37
    %v1095 = vunpack.c.h.b16 %v37
    %v1096 = vunpack.c.l.b16 %v38
    %v1097 = vunpack.c.h.b16 %v38
    %v1098 = vunpack.c.l.b16 %v39
    %v1099 = vunpack.c.h.b16 %v39
    %v1100 = vunpack.c.l.b16 %v40
    %v1101 = vunpack.c.h.b16 %v40
    %v1102 = vunpack.c.l.b16 %v41
    %v1103 = vunpack.c.h.b16 %v41
    %v1104 = vunpack.c.l.b16 %v42
    %v1105 = vunpack.c.h.b16 %v42
    %v1106 = vunpack.c.l.b16 %v43
    %v1107 = vunpack.c.h.b16 %v43
    %v1108 = vunpack.c.l.b16 %v44
    %v1109 = vunpack.c.h.b16 %v44
    %v1110 = vunpack.c.l.b16 %v45
    %v1111 = vunpack.c.h.b16 %v45
    %v1112 = vunpack.c.l.b16 %v46
    %v1113 = vunpack.c.h.b16 %v46
    %v1114 = vunpack.c.l.b16 %v47
    %v1115 = vunpack.c.h.b16 %v47
    %v1116 = vunpack.c.l.b16 %v48
    %v1117 = vunpack.c.h.b16 %v48
    %v1118 = vunpack.c.l.b16 %v49
    %v1119 = vunpack.c.h.b16 %v49
    %v1120 = vunpack.c.l.b16 %v50
    %v1121 = vunpack.c.h.b16 %v50
    %v1122 = vunpack.c.l.b16 %v51
    %v1123 = vunpack.c.h.b16 %v51
    %v1124 = vunpack.c.l.b16 %v52
    %v1125 = vunpack.c.h.b16 %v52
    %v1126 = vunpack.c.l.b16 %v53
    %v1127 = vunpack.c.h.b16 %v53
    %v1128 = vunpack.c.l.b16 %v54
    %v1129 = vunpack.c.h.b16 %v54
    %v1130 = vunpack.c.l.b16 %v55
    %v1131 = vunpack.c.h.b16 %v55
    %v1132 = vunpack.c.l.b16 %v56
    %v1133 = vunpack.c.h.b16 %v56
    %v1134 = vunpack.c.l.b16 %v57
    %v1135 = vunpack.c.h.b16 %v57
    %v1136 = vunpack.c.l.b16 %v58
    %v1137 = vunpack.c.h.b16 %v58
    %v1138 = vunpack.c.l.b16 %v59
    %v1139 = vunpack.c.h.b16 %v59
    %v1140 = vunpack.c.l.b16 %v60
    %v1141 = vunpack.c.h.b16 %v60
    %v1142 = vunpack.c.l.b16 %v61
    %v1143 = vunpack.c.h.b16 %v61
    %v1144 = vunpack.c.l.b16 %v62
    %v1145 = vunpack.c.h.b16 %v62
    %v1146 = vunpack.c.l.b16 %v63
    %v1147 = vunpack.c.h.b16 %v63
    %v1148 = vunpack.c.l.b16 %v64
    %v1149 = vunpack.c.h.b16 %v64
    %v1150 = vunpack.c.l.b16 %v65
    %v1151 = vunpack.c.h.b16 %v65
    %v1152 = vunpack.c.l.b16 %v66
    %v1153 = vunpack.c.h.b16 %v66
    %v1154 = vunpack.c.l.b16 %v67
    %v1155 = vunpack.c.h.b16 %v67
    %v1156 = vunpack.c.l.b16 %v68
    %v1157 = vunpack.c.h.b16 %v68
    %v1158 = vunpack.c.l.b16 %v69
    %v1159 = vunpack.c.h.b16 %v69
    %v1160 = vunpack.c.l.b16 %v70
    %v1161 = vunpack.c.h.b16 %v70
    %v1162 = vunpack.c.l.b16 %v71
    %v1163 = vunpack.c.h.b16 %v71
    %v1164 = vunpack.c.l.b16 %v72
    %v1165 = vunpack.c.h.b16 %v72
    %v1166 = vunpack.c.l.b16 %v73
    %v1167 = vunpack.c.h.b16 %v73
    %v1168 = vunpack.c.l.b16 %v74
    %v1169 = vunpack.c.h.b16 %v74
    %v1170 = vunpack.c.l.b16 %v75
    %v1171 = vunpack.c.h.b16 %v75
    %v1172 = vunpack.c.l.b16 %v76
    %v1173 = vunpack.c.h.b16 %v76
    %v1174 = vunpack.c.l.b16 %v77
    %v1175 = vunpack.c.h.b16 %v77
    %v1176 = vunpack.c.l.b16 %v78
    %v1177 = vunpack.c.h.b16 %v78
    %v1178 = vunpack.c.l.b16 %v79
    %v1179 = vunpack.c.h.b16 %v79
    %v1180 = vunpack.c.l.b16 %v80
    %v1181 = vunpack.c.h.b16 %v80
    %v1182 = vunpack.c.l.b16 %v81
    %v1183 = vunpack.c.h.b16 %v81
    %v1184 = vunpack.c.l.b16 %v82
    %v1185 = vunpack.c.h.b16 %v82
    %v1186 = vunpack.c.l.b16 %v83
    %v1187 = vunpack.c.h.b16 %v83
    %v1188 = vunpack.c.l.b16 %v84
    %v1189 = vunpack.c.h.b16 %v84
    %v1190 = vunpack.c.l.b16 %v85
    %v1191 = vunpack.c.h.b16 %v85
    %v1192 = vunpack.c.l.b16 %v86
    %v1193 = vunpack.c.h.b16 %v86
    %v1194 = vunpack.c.l.b16 %v87
    %v1195 = vunpack.c.h.b16 %v87
    %v1196 = vunpack.c.l.b16 %v88
    %v1197 = vunpack.c.h.b16 %v88
    %v1198 = vunpack.c.l.b16 %v89
    %v1199 = vunpack.c.h.b16 %v89
    %v1200 = vunpack.c.l.b16 %v90
    %v1201 = vunpack.c.h.b16 %v90
    %v1202 = vunpack.c.l.b16 %v91
    %v1203 = vunpack.c.h.b16 %v91
    %v1204 = vunpack.c.l.b16 %v92
    %v1205 = vunpack.c.h.b16 %v92
    %v1206 = vunpack.c.l.b16 %v93
    %v1207 = vunpack.c.h.b16 %v93
    %v1208 = vunpack.c.l.b16 %v94
    %v1209 = vunpack.c.h.b16 %v94
    %v1210 = vunpack.c.l.b16 %v95
    %v1211 = vunpack.c.h.b16 %v95
    %v1212 = vunpack.c.l.b16 %v96
    %v1213 = vunpack.c.h.b16 %v96
    %v1214 = vunpack.c.l.b16 %v97
    %v1215 = vunpack.c.h.b16 %v97
    %v1216 = vunpack.c.l.b16 %v98
    %v1217 = vunpack.c.h.b16 %v98
    %v1218 = vunpack.c.l.b16 %v99
    %v1219 = vunpack.c.h.b16 %v99
    %v1220 = vunpack.c.l.b16 %v100
    %v1221 = vunpack.c.h.b16 %v100
    %v1222 = vunpack.c.l.b16 %v101
    %v1223 = vunpack.c.h.b16 %v101
    %v1224 = vunpack.c.l.b16 %v102
    %v1225 = vunpack.c.h.b16 %v102
    %v1226 = vunpack.c.l.b16 %v103
    %v1227 = vunpack.c.h.b16 %v103
    %v1228 = vunpack.c.l.b16 %v104
    %v1229 = vunpack.c.h.b16 %v104
    %v1230 = vunpack.c.l.b16 %v105
    %v1231 = vunpack.c.h.b16 %v105
    %v1232 = vunpack.c.l.b16 %v106
    %v1233 = vunpack.c.h.b16 %v106
    %v1234 = vunpack.c.l.b16 %v107
    %v1235 = vunpack.c.h.b16 %v107
    %v1236 = vunpack.c.l.b16 %v108
    %v1237 = vunpack.c.h.b16 %v108
    %v1238 = vunpack.c.l.b16 %v109
    %v1239 = vunpack.c.h.b16 %v109
    %v1240 = vunpack.c.l.b16 %v110
    %v1241 = vunpack.c.h.b16 %v110
    %v1242 = vunpack.c.l.b16 %v111
    %v1243 = vunpack.c.h.b16 %v111
    %v1244 = vunpack.c.l.b16 %v112
    %v1245 = vunpack.c.h.b16 %v112
    %v1246 = vunpack.c.l.b16 %v113
    %v1247 = vunpack.c.h.b16 %v113
    %v1248 = vunpack.c.l.b16 %v114
    %v1249 = vunpack.c.h.b16 %v114
    %v1250 = vunpack.c.l.b16 %v115
    %v1251 = vunpack.c.h.b16 %v115
    %v1252 = vunpack.c.l.b16 %v116
    %v1253 = vunpack.c.h.b16 %v116
    %v1254 = vunpack.c.l.b16 %v117
    %v1255 = vunpack.c.h.b16 %v117
    %v1256 = vunpack.c.l.b16 %v118
    %v1257 = vunpack.c.h.b16 %v118
    %v1258 = vunpack.c.l.b16 %v119
    %v1259 = vunpack.c.h.b16 %v119
    %v1260 = vunpack.c.l.b16 %v120
    %v1261 = vunpack.c.h.b16 %v120
    %v1262 = vunpack.c.l.b16 %v121
    %v1263 = vunpack.c.h.b16 %v121
    %v1264 = vunpack.c.l.b16 %v122
    %v1265 = vunpack.c.h.b16 %v122
    %v1266 = vunpack.c.l.b16 %v123
    %v1267 = vunpack.c.h.b16 %v123
    %v1268 = vunpack.c.l.b16 %v124
    %v1269 = vunpack.c.h.b16 %v124
    %v1270 = vunpack.c.l.b16 %v125
    %v1271 = vunpack.c.h.b16 %v125
    %v1272 = vunpack.c.l.b16 %v126
    %v1273 = vunpack.c.h.b16 %v126
    %v1274 = vunpack.c.l.b16 %v127
    %v1275 = vunpack.c.h.b16 %v127
    %v1276 = vunpack.c.l.b16 %v128
    %v1277 = vunpack.c.h.b16 %v128
    %v1278 = vunpack.c.l.b16 %v129
    %v1279 = vunpack.c.h.b16 %v129
    %v1280 = vunpack.c.l.b16 %v130
    %v1281 = vunpack.c.h.b16 %v130
    %v1282 = vunpack.c.l.b16 %v131
    %v1283 = vunpack.c.h.b16 %v131
    %v1284 = vunpack.c.l.b16 %v132
    %v1285 = vunpack.c.h.b16 %v132
    %v1286 = vunpack.c.l.b16 %v133
    %v1287 = vunpack.c.h.b16 %v133
    %v1288 = vunpack.c.l.b16 %v134
    %v1289 = vunpack.c.h.b16 %v134
    %v1290 = vunpack.c.l.b16 %v135
    %v1291 = vunpack.c.h.b16 %v135
    %v1292 = vunpack.c.l.b16 %v136
    %v1293 = vunpack.c.h.b16 %v136
    %v1294 = vunpack.c.l.b16 %v137
    %v1295 = vunpack.c.h.b16 %v137
    %v1296 = vunpack.c.l.b16 %v138
    %v1297 = vunpack.c.h.b16 %v138
    %v1298 = vunpack.c.l.b16 %v139
    %v1299 = vunpack.c.h.b16 %v139
    %v1300 = vunpack.c.l.b16 %v140
    %v1301 = vunpack.c.h.b16 %v140
    %v1302 = vunpack.c.l.b16 %v141
    %v1303 = vunpack.c.h.b16 %v141
    %v1304 = vunpack.c.l.b16 %v142
    %v1305 = vunpack.c.h.b16 %v142
    %v1306 = vunpack.c.l.b16 %v143
    %v1307 = vunpack.c.h.b16 %v143
    %v1308 = vunpack.c.l.b16 %v144
    %v1309 = vunpack.c.h.b16 %v144
    %v1310 = vunpack.c.l.b16 %v145
    %v1311 = vunpack.c.h.b16 %v145
    %v1312 = vunpack.c.l.b16 %v146
    %v1313 = vunpack.c.h.b16 %v146
    %v1314 = vunpack.c.l.b16 %v147
    %v1315 = vunpack.c.h.b16 %v147
    %v1316 = vunpack.c.l.b16 %v148
    %v1317 = vunpack.c.h.b16 %v148
    %v1318 = vunpack.c.l.b16 %v149
    %v1319 = vunpack.c.h.b16 %v149
    %v1320 = vunpack.c.l.b16 %v150
    %v1321 = vunpack.c.h.b16 %v150
    %v1322 = vunpack.c.l.b16 %v151
    %v1323 = vunpack.c.h.b16 %v151
    %v1324 = vunpack.c.l.b16 %v152
    %v1325 = vunpack.c.h.b16 %v152
    %v1326 = vunpack.c.l.b16 %v153
    %v1327 = vunpack.c.h.b16 %v153
    %v1328 = vunpack.c.l.b16 %v154
    %v1329 = vunpack.c.h.b16 %v154
    %v1330 = vunpack.c.l.b16 %v155
    %v1331 = vunpack.c.h.b16 %v155
    %v1332 = vunpack.c.l.b16 %v156
    %v1333 = vunpack.c.h.b16 %v156
    %v1334 = vunpack.c.l.b16 %v157
    %v1335 = vunpack.c.h.b16 %v157
    %v1336 = vunpack.c.l.b16 %v158
    %v1337 = vunpack.c.h.b16 %v158
    %v1338 = vunpack.c.l.b16 %v159
    %v1339 = vunpack.c.h.b16 %v159
    %v1340 = vunpack.c.l.b16 %v160
    %v1341 = vunpack.c.h.b16 %v160
    %v1342 = vunpack.c.l.b16 %v161
    %v1343 = vunpack.c.h.b16 %v161
    %v1344 = vunpack.c.l.b16 %v162
    %v1345 = vunpack.c.h.b16 %v162
    %v1346 = vunpack.c.l.b16 %v163
    %v1347 = vunpack.c.h.b16 %v163
    %v1348 = vpack.c.b16 %v1094, %v1092
    %v1349 = vpack.c.b16 %v1095, %v1093
    %v1350 = vpack.c.b16 %v1098, %v1096
    %v1351 = vpack.c.b16 %v1099, %v1097
    %v1352 = vpack.c.b16 %v1102, %v1100
    %v1353 = vpack.c.b16 %v1103, %v1101
    %v1354 = vpack.c.b16 %v1106, %v1104
    %v1355 = vpack.c.b16 %v1107, %v1105
    %v1356 = vpack.c.b16 %v1110, %v1108
    %v1357 = vpack.c.b16 %v1111, %v1109
    %v1358 = vpack.c.b16 %v1114, %v1112
    %v1359 = vpack.c.b16 %v1115, %v1113
    %v1360 = vpack.c.b16 %v1118, %v1116
    %v1361 = vpack.c.b16 %v1119, %v1117
    %v1362 = vpack.c.b16 %v1122, %v1120
    %v1363 = vpack.c.b16 %v1123, %v1121
    %v1364 = vpack.c.b16 %v1126, %v1124
    %v1365 = vpack.c.b16 %v1127, %v1125
    %v1366 = vpack.c.b16 %v1130, %v1128
    %v1367 = vpack.c.b16 %v1131, %v1129
    %v1368 = vpack.c.b16 %v1134, %v1132
    %v1369 = vpack.c.b16 %v1135, %v1133
    %v1370 = vpack.c.b16 %v1138, %v1136
    %v1371 = vpack.c.b16 %v1139, %v1137
    %v1372 = vpack.c.b16 %v1142, %v1140
    %v1373 = vpack.c.b16 %v1143, %v1141
    %v1374 = vpack.c.b16 %v1146, %v1144
    %v1375 = vpack.c.b16 %v1147, %v1145
    %v1376 = vpack.c.b16 %v1150, %v1148
    %v1377 = vpack.c.b16 %v1151, %v1149
    %v1378 = vpack.c.b16 %v1154, %v1152
    %v1379 = vpack.c.b16 %v1155, %v1153
    %v1380 = vpack.c.b16 %v1158, %v1156
    %v1381 = vpack.c.b16 %v1159, %v1157
    %v1382 = vpack.c.b16 %v1162, %v1160
    %v1383 = vpack.c.b16 %v1163, %v1161
    %v1384 = vpack.c.b16 %v1166, %v1164
    %v1385 = vpack.c.b16 %v1167, %v1165
    %v1386 = vpack.c.b16 %v1170, %v1168
    %v1387 = vpack.c.b16 %v1171, %v1169
    %v1388 = vpack.c.b16 %v1174, %v1172
    %v1389 = vpack.c.b16 %v1175, %v1173
    %v1390 = vpack.c.b16 %v1178, %v1176
    %v1391 = vpack.c.b16 %v1179, %v1177
    %v1392 = vpack.c.b16 %v1182, %v1180
    %v1393 = vpack.c.b16 %v1183, %v1181
    %v1394 = vpack.c.b16 %v1186, %v1184
    %v1395 = vpack.c.b16 %v1187, %v1185
    %v1396 = vpack.c.b16 %v1190, %v1188
    %v1397 = vpack.c.b16 %v1191, %v1189
    %v1398 = vpack.c.b16 %v1194, %v1192
    %v1399 = vpack.c.b16 %v1195, %v1193
    %v1400 = vpack.c.b16 %v1198, %v1196
    %v1401 = vpack.c.b16 %v1199, %v1197
    %v1402 = vpack.c.b16 %v1202, %v1200
    %v1403 = vpack.c.b16 %v1203, %v1201
    %v1404 = vpack.c.b16 %v1206, %v1204
    %v1405 = vpack.c.b16 %v1207, %v1205
    %v1406 = vpack.c.b16 %v1210, %v1208
    %v1407 = vpack.c.b16 %v1211, %v1209
    %v1408 = vpack.c.b16 %v1214, %v1212
    %v1409 = vpack.c.b16 %v1215, %v1213
    %v1410 = vpack.c.b16 %v1218, %v1216
    %v1411 = vpack.c.b16 %v1219, %v1217
    %v1412 = vpack.c.b16 %v1222, %v1220
    %v1413 = vpack.c.b16 %v1223, %v1221
    %v1414 = vpack.c.b16 %v1226, %v1224
    %v1415 = vpack.c.b16 %v1227, %v1225
    %v1416 = vpack.c.b16 %v1230, %v1228
    %v1417 = vpack.c.b16 %v1231, %v1229
    %v1418 = vpack.c.b16 %v1234, %v1232
    %v1419 = vpack.c.b16 %v1235, %v1233
    %v1420 = vpack.c.b16 %v1238, %v1236
    %v1421 = vpack.c.b16 %v1239, %v1237
    %v1422 = vpack.c.b16 %v1242, %v1240
    %v1423 = vpack.c.b16 %v1243, %v1241
    %v1424 = vpack.c.b16 %v1246, %v1244
    %v1425 = vpack.c.b16 %v1247, %v1245
    %v1426 = vpack.c.b16 %v1250, %v1248
    %v1427 = vpack.c.b16 %v1251, %v1249
    %v1428 = vpack.c.b16 %v1254, %v1252
    %v1429 = vpack.c.b16 %v1255, %v1253
    %v1430 = vpack.c.b16 %v1258, %v1256
    %v1431 = vpack.c.b16 %v1259, %v1257
    %v1432 = vpack.c.b16 %v1262, %v1260
    %v1433 = vpack.c.b16 %v1263, %v1261
    %v1434 = vpack.c.b16 %v1266, %v1264
    %v1435 = vpack.c.b16 %v1267, %v1265
    %v1436 = vpack.c.b16 %v1270, %v1268
    %v1437 = vpack.c.b16 %v1271, %v1269
    %v1438 = vpack.c.b16 %v1274, %v1272
    %v1439 = vpack.c.b16 %v1275, %v1273
    %v1440 = vpack.c.b16 %v1278, %v1276
    %v1441 = vpack.c.b16 %v1279, %v1277
    %v1442 = vpack.c.b16 %v1282, %v1280
    %v1443 = vpack.c.b16 %v1283, %v1281
    %v1444 = vpack.c.b16 %v1286, %v1284
    %v1445 = vpack.c.b16 %v1287, %v1285
    %v1446 = vpack.c.b16 %v1290, %v1288
    %v1447 = vpack.c.b16 %v1291, %v1289
    %v1448 = vpack.c.b16 %v1294, %v1292
    %v1449 = vpack.c.b16 %v1295, %v1293
    %v1450 = vpack.c.b16 %v1298, %v1296
    %v1451 = vpack.c.b16 %v1299, %v1297
    %v1452 = vpack.c.b16 %v1302, %v1300
    %v1453 = vpack.c.b16 %v1303, %v1301
    %v1454 = vpack.c.b16 %v1306, %v1304
    %v1455 = vpack.c.b16 %v1307, %v1305
    %v1456 = vpack.c.b16 %v1310, %v1308
    %v1457 = vpack.c.b16 %v1311, %v1309
    %v1458 = vpack.c.b16 %v1314, %v1312
    %v1459 = vpack.c.b16 %v1315, %v1313
    %v1460 = vpack.c.b16 %v1318, %v1316
    %v1461 = vpack.c.b16 %v1319, %v1317
    %v1462 = vpack.c.b16 %v1322, %v1320
    %v1463 = vpack.c.b16 %v1323, %v1321
    %v1464 = vpack.c.b16 %v1326, %v1324
    %v1465 = vpack.c.b16 %v1327, %v1325
    %v1466 = vpack.c.b16 %v1330, %v1328
    %v1467 = vpack.c.b16 %v1331, %v1329
    %v1468 = vpack.c.b16 %v1334, %v1332
    %v1469 = vpack.c.b16 %v1335, %v1333
    %v1470 = vpack.c.b16 %v1338, %v1336
    %v1471 = vpack.c.b16 %v1339, %v1337
    %v1472 = vpack.c.b16 %v1342, %v1340
    %v1473 = vpack.c.b16 %v1343, %v1341
    %v1474 = vpack.c.b16 %v1346, %v1344
    %v1475 = vpack.c.b16 %v1347, %v1345
    %v1636 = vunpack.c.l.b16 %v164
    %v1637 = vunpack.c.l.b16 %v165
    %v1638 = vunpack.c.l.b16 %v166
    %v1639 = vunpack.c.l.b16 %v167
    %v1640 = vunpack.c.l.b16 %v168
    %v1641 = vunpack.c.l.b16 %v169
    %v1642 = vunpack.c.l.b16 %v170
    %v1643 = vunpack.c.l.b16 %v171
    %v1644 = vunpack.c.l.b16 %v172
    %v1645 = vunpack.c.l.b16 %v173
    %v1646 = vunpack.c.l.b16 %v174
    %v1647 = vunpack.c.l.b16 %v175
    %v1648 = vunpack.c.l.b16 %v176
    %v1649 = vunpack.c.l.b16 %v177
    %v1650 = vunpack.c.l.b16 %v178
    %v1651 = vunpack.c.l.b16 %v179
    %v1652 = vunpack.c.l.b16 %v180
    %v1653 = vunpack.c.l.b16 %v181
    %v1654 = vunpack.c.l.b16 %v182
    %v1655 = vunpack.c.l.b16 %v183
    %v1656 = vunpack.c.l.b16 %v184
    %v1657 = vunpack.c.l.b16 %v185
    %v1658 = vunpack.c.l.b16 %v186
    %v1659 = vunpack.c.l.b16 %v187
    %v1660 = vunpack.c.l.b16 %v188
    %v1661 = vunpack.c.l.b16 %v189
    %v1662 = vunpack.c.l.b16 %v190
    %v1663 = vunpack.c.l.b16 %v191
    %v1664 = vunpack.c.l.b16 %v192
    %v1665 = vunpack.c.l.b16 %v193
    %v1666 = vunpack.c.l.b16 %v194
    %v1667 = vunpack.c.l.b16 %v195
    %v1668 = vpack.c.b16 %v1637, %v1636
    %v1669 = vpack.c.b16 %v1639, %v1638
    %v1670 = vpack.c.b16 %v1641, %v1640
    %v1671 = vpack.c.b16 %v1643, %v1642
    %v1672 = vpack.c.b16 %v1645, %v1644
    %v1673 = vpack.c.b16 %v1647, %v1646
    %v1674 = vpack.c.b16 %v1649, %v1648
    %v1675 = vpack.c.b16 %v1651, %v1650
    %v1676 = vpack.c.b16 %v1653, %v1652
    %v1677 = vpack.c.b16 %v1655, %v1654
    %v1678 = vpack.c.b16 %v1657, %v1656
    %v1679 = vpack.c.b16 %v1659, %v1658
    %v1680 = vpack.c.b16 %v1661, %v1660
    %v1681 = vpack.c.b16 %v1663, %v1662
    %v1682 = vpack.c.b16 %v1665, %v1664
    %v1683 = vpack.c.b16 %v1667, %v1666
    %1700 = vmatprep.subr.bf16.mxu0 0
    %1701 = vmatpush1.bf16.msra.mxu0 %v1668
    %1702 = vmatprep.subr.bf16.mxu0 0
    %1703 = vmatpush1.bf16.msra.mxu0 %v1669
    %1704 = vmatprep.subr.bf16.mxu0 0
    %1705 = vmatpush1.bf16.msra.mxu0 %v1670
    %1706 = vmatprep.subr.bf16.mxu0 0
    %1707 = vmatpush1.bf16.msra.mxu0 %v1671
    %1708 = vmatprep.subr.bf16.mxu0 0
    %1709 = vmatpush1.bf16.msra.mxu0 %v1672
    %1710 = vmatprep.subr.bf16.mxu0 0
    %1711 = vmatpush1.bf16.msra.mxu0 %v1673
    %1712 = vmatprep.subr.bf16.mxu0 0
    %1713 = vmatpush1.bf16.msra.mxu0 %v1674
    %1714 = vmatprep.subr.bf16.mxu0 0
    %1715 = vmatpush1.bf16.msra.mxu0 %v1675
    %1716 = vmatprep.subr.bf16.mxu0 0
    %1717 = vmatpush1.bf16.msra.mxu0 %v1676
    %1718 = vmatprep.subr.bf16.mxu0 0
    %1719 = vmatpush1.bf16.msra.mxu0 %v1677
    %1720 = vmatprep.subr.bf16.mxu0 0
    %1721 = vmatpush1.bf16.msra.mxu0 %v1678
    %1722 = vmatprep.subr.bf16.mxu0 0
    %1723 = vmatpush1.bf16.msra.mxu0 %v1679
    %1724 = vmatprep.subr.bf16.mxu0 0
    %1725 = vmatpush1.bf16.msra.mxu0 %v1680
    %1726 = vmatprep.subr.bf16.mxu0 0
    %1727 = vmatpush1.bf16.msra.mxu0 %v1681
    %1728 = vmatprep.subr.bf16.mxu0 0
    %1729 = vmatpush1.bf16.msra.mxu0 %v1682
    %1730 = vmatprep.subr.bf16.mxu0 0
    %1731 = vmatpush1.bf16.msra.mxu0 %v1683
    %1732 = vmatprep.mubr.bf16.mxu0 %v1349
    %1733 = vmatmul.mubr.bf16.gmra.mrb[0].mxu0 %v1348
    %v1734 = vpop.f32.mrb[0].mxu0
    %v1735 = vadd.f32 %v327, %v1734
    %v1736 = vpop.f32.mrb[0].mxu0
    %v1737 = vpop.f32.mrb[0].mxu0
    %v1738 = vadd.f32 %v332, %v1737
    %v1739 = vpop.f32.mrb[0].mxu0
    %1740 = vmatprep.mubr.bf16.mxu0 %v1351
    %1741 = vmatmul.mubr.bf16.gmra.mrb[0].mxu0 %v1350
    %v1742 = vpop.f32.mrb[0].mxu0
    %v1743 = vadd.f32 %v337, %v1742
    %v1744 = vpop.f32.mrb[0].mxu0
    %v1745 = vpop.f32.mrb[0].mxu0
    %v1746 = vadd.f32 %v342, %v1745
    %v1747 = vpop.f32.mrb[0].mxu0
    %1748 = vmatprep.mubr.bf16.mxu0 %v1353
    %1749 = vmatmul.mubr.bf16.gmra.mrb[0].mxu0 %v1352
    %v1750 = vpop.f32.mrb[0].mxu0
    %v1751 = vadd.f32 %v347, %v1750
    %v1752 = vpop.f32.mrb[0].mxu0
    %v1753 = vpop.f32.mrb[0].mxu0
    %v1754 = vadd.f32 %v352, %v1753
    %v1755 = vpop.f32.mrb[0].mxu0
    %1756 = vmatprep.mubr.bf16.mxu0 %v1355
    %1757 = vmatmul.mubr.bf16.gmra.mrb[0].mxu0 %v1354
    %v1758 = vpop.f32.mrb[0].mxu0
    %v1759 = vadd.f32 %v357, %v1758
    %v1760 = vpop.f32.mrb[0].mxu0
    %v1761 = vpop.f32.mrb[0].mxu0
    %v1762 = vadd.f32 %v362, %v1761
    %v1763 = vpop.f32.mrb[0].mxu0
    %1764 = vmatprep.mubr.bf16.mxu0 %v1357
    %1765 = vmatmul.mubr.bf16.gmra.mrb[0].mxu0 %v1356
    %v1766 = vpop.f32.mrb[0].mxu0
    %v1767 = vadd.f32 %v367, %v1766
    %v1768 = vpop.f32.mrb[0].mxu0
    %v1769 = vpop.f32.mrb[0].mxu0
    %v1770 = vadd.f32 %v372, %v1769
    %v1771 = vpop.f32.mrb[0].mxu0
    %1772 = vmatprep.mubr.bf16.mxu0 %v1359
    %1773 = vmatmul.mubr.bf16.gmra.mrb[0].mxu0 %v1358
    %v1774 = vpop.f32.mrb[0].mxu0
    %v1775 = vadd.f32 %v377, %v1774
    %v1776 = vpop.f32.mrb[0].mxu0
    %v1777 = vpop.f32.mrb[0].mxu0
    %v1778 = vadd.f32 %v382, %v1777
    %v1779 = vpop.f32.mrb[0].mxu0
    %1780 = vmatprep.mubr.bf16.mxu0 %v1361
    %1781 = vmatmul.mubr.bf16.gmra.mrb[0].mxu0 %v1360
    %v1782 = vpop.f32.mrb[0].mxu0
    %v1783 = vadd.f32 %v387, %v1782
    %v1784 = vpop.f32.mrb[0].mxu0
    %v1785 = vpop.f32.mrb[0].mxu0
    %v1786 = vadd.f32 %v392, %v1785
    %v1787 = vpop.f32.mrb[0].mxu0
    %1788 = vmatprep.mubr.bf16.mxu0 %v1363
    %1789 = vmatmul.mubr.bf16.gmra.mrb[0].mxu0 %v1362
    %v1790 = vpop.f32.mrb[0].mxu0
    %v1791 = vadd.f32 %v397, %v1790
    %v1792 = vpop.f32.mrb[0].mxu0
    %v1793 = vpop.f32.mrb[0].mxu0
    %v1794 = vadd.f32 %v402, %v1793
    %v1795 = vpop.f32.mrb[0].mxu0
    %1796 = vmatprep.mubr.bf16.mxu0 %v1365
    %1797 = vmatmul.mubr.bf16.gmra.mrb[0].mxu0 %v1364
    %v1798 = vpop.f32.mrb[0].mxu0
    %v1799 = vadd.f32 %v407, %v1798
    %v1800 = vpop.f32.mrb[0].mxu0
    %v1801 = vpop.f32.mrb[0].mxu0
    %v1802 = vadd.f32 %v412, %v1801
    %v1803 = vpop.f32.mrb[0].mxu0
    %1804 = vmatprep.mubr.bf16.mxu0 %v1367
    %1805 = vmatmul.mubr.bf16.gmra.mrb[0].mxu0 %v1366
    %v1806 = vpop.f32.mrb[0].mxu0
    %v1807 = vadd.f32 %v417, %v1806
    %v1808 = vpop.f32.mrb[0].mxu0
    %v1809 = vpop.f32.mrb[0].mxu0
    %v1810 = vadd.f32 %v422, %v1809
    %v1811 = vpop.f32.mrb[0].mxu0
    %1812 = vmatprep.mubr.bf16.mxu0 %v1369
    %1813 = vmatmul.mubr.bf16.gmra.mrb[0].mxu0 %v1368
    %v1814 = vpop.f32.mrb[0].mxu0
    %v1815 = vadd.f32 %v427, %v1814
    %v1816 = vpop.f32.mrb[0].mxu0
    %v1817 = vpop.f32.mrb[0].mxu0
    %v1818 = vadd.f32 %v432, %v1817
    %v1819 = vpop.f32.mrb[0].mxu0
    %1820 = vmatprep.mubr.bf16.mxu0 %v1371
    %1821 = vmatmul.mubr.bf16.gmra.mrb[0].mxu0 %v1370
    %v1822 = vpop.f32.mrb[0].mxu0
    %v1823 = vadd.f32 %v437, %v1822
    %v1824 = vpop.f32.mrb[0].mxu0
    %v1825 = vpop.f32.mrb[0].mxu0
    %v1826 = vadd.f32 %v442, %v1825
    %v1827 = vpop.f32.mrb[0].mxu0
    %1828 = vmatprep.mubr.bf16.mxu0 %v1373
    %1829 = vmatmul.mubr.bf16.gmra.mrb[0].mxu0 %v1372
    %v1830 = vpop.f32.mrb[0].mxu0
    %v1831 = vadd.f32 %v447, %v1830
    %v1832 = vpop.f32.mrb[0].mxu0
    %v1833 = vpop.f32.mrb[0].mxu0
    %v1834 = vadd.f32 %v452, %v1833
    %v1835 = vpop.f32.mrb[0].mxu0
    %1836 = vmatprep.mubr.bf16.mxu0 %v1375
    %1837 = vmatmul.mubr.bf16.gmra.mrb[0].mxu0 %v1374
    %v1838 = vpop.f32.mrb[0].mxu0
    %v1839 = vadd.f32 %v457, %v1838
    %v1840 = vpop.f32.mrb[0].mxu0
    %v1841 = vpop.f32.mrb[0].mxu0
    %v1842 = vadd.f32 %v462, %v1841
    %v1843 = vpop.f32.mrb[0].mxu0
    %1844 = vmatprep.mubr.bf16.mxu0 %v1377
    %1845 = vmatmul.mubr.bf16.gmra.mrb[0].mxu0 %v1376
    %v1846 = vpop.f32.mrb[0].mxu0
    %v1847 = vadd.f32 %v467, %v1846
    %v1848 = vpop.f32.mrb[0].mxu0
    %v1849 = vpop.f32.mrb[0].mxu0
    %v1850 = vadd.f32 %v472, %v1849
    %v1851 = vpop.f32.mrb[0].mxu0
    %1852 = vmatprep.mubr.bf16.mxu0 %v1379
    %1853 = vmatmul.mubr.bf16.gmra.mrb[0].mxu0 %v1378
    %v1854 = vpop.f32.mrb[0].mxu0
    %v1855 = vadd.f32 %v477, %v1854
    %v1856 = vpop.f32.mrb[0].mxu0
    %v1857 = vpop.f32.mrb[0].mxu0
    %v1858 = vadd.f32 %v482, %v1857
    %v1859 = vpop.f32.mrb[0].mxu0
    %1860 = vmatprep.mubr.bf16.mxu0 %v1381
    %1861 = vmatmul.mubr.bf16.gmra.mrb[0].mxu0 %v1380
    %v1862 = vpop.f32.mrb[0].mxu0
    %v1863 = vadd.f32 %v487, %v1862
    %v1864 = vpop.f32.mrb[0].mxu0
    %v1865 = vpop.f32.mrb[0].mxu0
    %v1866 = vadd.f32 %v492, %v1865
    %v1867 = vpop.f32.mrb[0].mxu0
    %1868 = vmatprep.mubr.bf16.mxu0 %v1383
    %1869 = vmatmul.mubr.bf16.gmra.mrb[0].mxu0 %v1382
    %v1870 = vpop.f32.mrb[0].mxu0
    %v1871 = vadd.f32 %v497, %v1870
    %v1872 = vpop.f32.mrb[0].mxu0
    %v1873 = vpop.f32.mrb[0].mxu0
    %v1874 = vadd.f32 %v502, %v1873
    %v1875 = vpop.f32.mrb[0].mxu0
    %1876 = vmatprep.mubr.bf16.mxu0 %v1385
    %1877 = vmatmul.mubr.bf16.gmra.mrb[0].mxu0 %v1384
    %v1878 = vpop.f32.mrb[0].mxu0
    %v1879 = vadd.f32 %v507, %v1878
    %v1880 = vpop.f32.mrb[0].mxu0
    %v1881 = vpop.f32.mrb[0].mxu0
    %v1882 = vadd.f32 %v512, %v1881
    %v1883 = vpop.f32.mrb[0].mxu0
    %1884 = vmatprep.mubr.bf16.mxu0 %v1387
    %1885 = vmatmul.mubr.bf16.gmra.mrb[0].mxu0 %v1386
    %v1886 = vpop.f32.mrb[0].mxu0
    %v1887 = vadd.f32 %v517, %v1886
    %v1888 = vpop.f32.mrb[0].mxu0
    %v1889 = vpop.f32.mrb[0].mxu0
    %v1890 = vadd.f32 %v522, %v1889
    %v1891 = vpop.f32.mrb[0].mxu0
    %1892 = vmatprep.mubr.bf16.mxu0 %v1389
    %1893 = vmatmul.mubr.bf16.gmra.mrb[0].mxu0 %v1388
    %v1894 = vpop.f32.mrb[0].mxu0
    %v1895 = vadd.f32 %v527, %v1894
    %v1896 = vpop.f32.mrb[0].mxu0
    %v1897 = vpop.f32.mrb[0].mxu0
    %v1898 = vadd.f32 %v532, %v1897
    %v1899 = vpop.f32.mrb[0].mxu0
    %1900 = vmatprep.mubr.bf16.mxu0 %v1391
    %1901 = vmatmul.mubr.bf16.gmra.mrb[0].mxu0 %v1390
    %v1902 = vpop.f32.mrb[0].mxu0
    %v1903 = vadd.f32 %v537, %v1902
    %v1904 = vpop.f32.mrb[0].mxu0
    %v1905 = vpop.f32.mrb[0].mxu0
    %v1906 = vadd.f32 %v542, %v1905
    %v1907 = vpop.f32.mrb[0].mxu0
    %1908 = vmatprep.mubr.bf16.mxu0 %v1393
    %1909 = vmatmul.mubr.bf16.gmra.mrb[0].mxu0 %v1392
    %v1910 = vpop.f32.mrb[0].mxu0
    %v1911 = vadd.f32 %v547, %v1910
    %v1912 = vpop.f32.mrb[0].mxu0
    %v1913 = vpop.f32.mrb[0].mxu0
    %v1914 = vadd.f32 %v552, %v1913
    %v1915 = vpop.f32.mrb[0].mxu0
    %1916 = vmatprep.mubr.bf16.mxu0 %v1395
    %1917 = vmatmul.mubr.bf16.gmra.mrb[0].mxu0 %v1394
    %v1918 = vpop.f32.mrb[0].mxu0
    %v1919 = vadd.f32 %v557, %v1918
    %v1920 = vpop.f32.mrb[0].mxu0
    %v1921 = vpop.f32.mrb[0].mxu0
    %v1922 = vadd.f32 %v562, %v1921
    %v1923 = vpop.f32.mrb[0].mxu0
    %1924 = vmatprep.mubr.bf16.mxu0 %v1397
    %1925 = vmatmul.mubr.bf16.gmra.mrb[0].mxu0 %v1396
    %v1926 = vpop.f32.mrb[0].mxu0
    %v1927 = vadd.f32 %v567, %v1926
    %v1928 = vpop.f32.mrb[0].mxu0
    %v1929 = vpop.f32.mrb[0].mxu0
    %v1930 = vadd.f32 %v572, %v1929
    %v1931 = vpop.f32.mrb[0].mxu0
    %1932 = vmatprep.mubr.bf16.mxu0 %v1399
    %1933 = vmatmul.mubr.bf16.gmra.mrb[0].mxu0 %v1398
    %v1934 = vpop.f32.mrb[0].mxu0
    %v1935 = vadd.f32 %v577, %v1934
    %v1936 = vpop.f32.mrb[0].mxu0
    %v1937 = vpop.f32.mrb[0].mxu0
    %v1938 = vadd.f32 %v582, %v1937
    %v1939 = vpop.f32.mrb[0].mxu0
    %1940 = vmatprep.mubr.bf16.mxu0 %v1401
    %1941 = vmatmul.mubr.bf16.gmra.mrb[0].mxu0 %v1400
    %v1942 = vpop.f32.mrb[0].mxu0
    %v1943 = vadd.f32 %v587, %v1942
    %v1944 = vpop.f32.mrb[0].mxu0
    %v1945 = vpop.f32.mrb[0].mxu0
    %v1946 = vadd.f32 %v592, %v1945
    %v1947 = vpop.f32.mrb[0].mxu0
    %1948 = vmatprep.mubr.bf16.mxu0 %v1403
    %1949 = vmatmul.mubr.bf16.gmra.mrb[0].mxu0 %v1402
    %v1950 = vpop.f32.mrb[0].mxu0
    %v1951 = vadd.f32 %v597, %v1950
    %v1952 = vpop.f32.mrb[0].mxu0
    %v1953 = vpop.f32.mrb[0].mxu0
    %v1954 = vadd.f32 %v602, %v1953
    %v1955 = vpop.f32.mrb[0].mxu0
    %1956 = vmatprep.mubr.bf16.mxu0 %v1405
    %1957 = vmatmul.mubr.bf16.gmra.mrb[0].mxu0 %v1404
    %v1958 = vpop.f32.mrb[0].mxu0
    %v1959 = vadd.f32 %v607, %v1958
    %v1960 = vpop.f32.mrb[0].mxu0
    %v1961 = vpop.f32.mrb[0].mxu0
    %v1962 = vadd.f32 %v612, %v1961
    %v1963 = vpop.f32.mrb[0].mxu0
    %1964 = vmatprep.mubr.bf16.mxu0 %v1407
    %1965 = vmatmul.mubr.bf16.gmra.mrb[0].mxu0 %v1406
    %v1966 = vpop.f32.mrb[0].mxu0
    %v1967 = vadd.f32 %v617, %v1966
    %v1968 = vpop.f32.mrb[0].mxu0
    %v1969 = vpop.f32.mrb[0].mxu0
    %v1970 = vadd.f32 %v622, %v1969
    %v1971 = vpop.f32.mrb[0].mxu0
    %1972 = vmatprep.mubr.bf16.mxu0 %v1409
    %1973 = vmatmul.mubr.bf16.gmra.mrb[0].mxu0 %v1408
    %v1974 = vpop.f32.mrb[0].mxu0
    %v1975 = vadd.f32 %v627, %v1974
    %v1976 = vpop.f32.mrb[0].mxu0
    %v1977 = vpop.f32.mrb[0].mxu0
    %v1978 = vadd.f32 %v632, %v1977
    %v1979 = vpop.f32.mrb[0].mxu0
    %1980 = vmatprep.mubr.bf16.mxu0 %v1411
    %1981 = vmatmul.mubr.bf16.gmra.mrb[0].mxu0 %v1410
    %v1982 = vpop.f32.mrb[0].mxu0
    %v1983 = vadd.f32 %v637, %v1982
    %v1984 = vpop.f32.mrb[0].mxu0
    %v1985 = vpop.f32.mrb[0].mxu0
    %v1986 = vadd.f32 %v642, %v1985
    %v1987 = vpop.f32.mrb[0].mxu0
    %1988 = vmatprep.mubr.bf16.mxu0 %v1413
    %1989 = vmatmul.mubr.bf16.gmra.mrb[0].mxu0 %v1412
    %v1990 = vpop.f32.mrb[0].mxu0
    %v1991 = vadd.f32 %v647, %v1990
    %v1992 = vpop.f32.mrb[0].mxu0
    %v1993 = vpop.f32.mrb[0].mxu0
    %v1994 = vadd.f32 %v652, %v1993
    %v1995 = vpop.f32.mrb[0].mxu0
    %1996 = vmatprep.mubr.bf16.mxu0 %v1415
    %1997 = vmatmul.mubr.bf16.gmra.mrb[0].mxu0 %v1414
    %v1998 = vpop.f32.mrb[0].mxu0
    %v1999 = vadd.f32 %v657, %v1998
    %v2000 = vpop.f32.mrb[0].mxu0
    %v2001 = vpop.f32.mrb[0].mxu0
    %v2002 = vadd.f32 %v662, %v2001
    %v2003 = vpop.f32.mrb[0].mxu0
    %2004 = vmatprep.mubr.bf16.mxu0 %v1417
    %2005 = vmatmul.mubr.bf16.gmra.mrb[0].mxu0 %v1416
    %v2006 = vpop.f32.mrb[0].mxu0
    %v2007 = vadd.f32 %v667, %v2006
    %v2008 = vpop.f32.mrb[0].mxu0
    %v2009 = vpop.f32.mrb[0].mxu0
    %v2010 = vadd.f32 %v672, %v2009
    %v2011 = vpop.f32.mrb[0].mxu0
    %2012 = vmatprep.mubr.bf16.mxu0 %v1419
    %2013 = vmatmul.mubr.bf16.gmra.mrb[0].mxu0 %v1418
    %v2014 = vpop.f32.mrb[0].mxu0
    %v2015 = vadd.f32 %v677, %v2014
    %v2016 = vpop.f32.mrb[0].mxu0
    %v2017 = vpop.f32.mrb[0].mxu0
    %v2018 = vadd.f32 %v682, %v2017
    %v2019 = vpop.f32.mrb[0].mxu0
    %2020 = vmatprep.mubr.bf16.mxu0 %v1421
    %2021 = vmatmul.mubr.bf16.gmra.mrb[0].mxu0 %v1420
    %v2022 = vpop.f32.mrb[0].mxu0
    %v2023 = vadd.f32 %v687, %v2022
    %v2024 = vpop.f32.mrb[0].mxu0
    %v2025 = vpop.f32.mrb[0].mxu0
    %v2026 = vadd.f32 %v692, %v2025
    %v2027 = vpop.f32.mrb[0].mxu0
    %2028 = vmatprep.mubr.bf16.mxu0 %v1423
    %2029 = vmatmul.mubr.bf16.gmra.mrb[0].mxu0 %v1422
    %v2030 = vpop.f32.mrb[0].mxu0
    %v2031 = vadd.f32 %v697, %v2030
    %v2032 = vpop.f32.mrb[0].mxu0
    %v2033 = vpop.f32.mrb[0].mxu0
    %v2034 = vadd.f32 %v702, %v2033
    %v2035 = vpop.f32.mrb[0].mxu0
    %2036 = vmatprep.mubr.bf16.mxu0 %v1425
    %2037 = vmatmul.mubr.bf16.gmra.mrb[0].mxu0 %v1424
    %v2038 = vpop.f32.mrb[0].mxu0
    %v2039 = vadd.f32 %v707, %v2038
    %v2040 = vpop.f32.mrb[0].mxu0
    %v2041 = vpop.f32.mrb[0].mxu0
    %v2042 = vadd.f32 %v712, %v2041
    %v2043 = vpop.f32.mrb[0].mxu0
    %2044 = vmatprep.mubr.bf16.mxu0 %v1427
    %2045 = vmatmul.mubr.bf16.gmra.mrb[0].mxu0 %v1426
    %v2046 = vpop.f32.mrb[0].mxu0
    %v2047 = vadd.f32 %v717, %v2046
    %v2048 = vpop.f32.mrb[0].mxu0
    %v2049 = vpop.f32.mrb[0].mxu0
    %v2050 = vadd.f32 %v722, %v2049
    %v2051 = vpop.f32.mrb[0].mxu0
    %2052 = vmatprep.mubr.bf16.mxu0 %v1429
    %2053 = vmatmul.mubr.bf16.gmra.mrb[0].mxu0 %v1428
    %v2054 = vpop.f32.mrb[0].mxu0
    %v2055 = vadd.f32 %v727, %v2054
    %v2056 = vpop.f32.mrb[0].mxu0
    %v2057 = vpop.f32.mrb[0].mxu0
    %v2058 = vadd.f32 %v732, %v2057
    %v2059 = vpop.f32.mrb[0].mxu0
    %2060 = vmatprep.mubr.bf16.mxu0 %v1431
    %2061 = vmatmul.mubr.bf16.gmra.mrb[0].mxu0 %v1430
    %v2062 = vpop.f32.mrb[0].mxu0
    %v2063 = vadd.f32 %v737, %v2062
    %v2064 = vpop.f32.mrb[0].mxu0
    %v2065 = vpop.f32.mrb[0].mxu0
    %v2066 = vadd.f32 %v742, %v2065
    %v2067 = vpop.f32.mrb[0].mxu0
    %2068 = vmatprep.mubr.bf16.mxu0 %v1433
    %2069 = vmatmul.mubr.bf16.gmra.mrb[0].mxu0 %v1432
    %v2070 = vpop.f32.mrb[0].mxu0
    %v2071 = vadd.f32 %v747, %v2070
    %v2072 = vpop.f32.mrb[0].mxu0
    %v2073 = vpop.f32.mrb[0].mxu0
    %v2074 = vadd.f32 %v752, %v2073
    %v2075 = vpop.f32.mrb[0].mxu0
    %2076 = vmatprep.mubr.bf16.mxu0 %v1435
    %2077 = vmatmul.mubr.bf16.gmra.mrb[0].mxu0 %v1434
    %v2078 = vpop.f32.mrb[0].mxu0
    %v2079 = vadd.f32 %v757, %v2078
    %v2080 = vpop.f32.mrb[0].mxu0
    %v2081 = vpop.f32.mrb[0].mxu0
    %v2082 = vadd.f32 %v762, %v2081
    %v2083 = vpop.f32.mrb[0].mxu0
    %2084 = vmatprep.mubr.bf16.mxu0 %v1437
    %2085 = vmatmul.mubr.bf16.gmra.mrb[0].mxu0 %v1436
    %v2086 = vpop.f32.mrb[0].mxu0
    %v2087 = vadd.f32 %v767, %v2086
    %v2088 = vpop.f32.mrb[0].mxu0
    %v2089 = vpop.f32.mrb[0].mxu0
    %v2090 = vadd.f32 %v772, %v2089
    %v2091 = vpop.f32.mrb[0].mxu0
    %2092 = vmatprep.mubr.bf16.mxu0 %v1439
    %2093 = vmatmul.mubr.bf16.gmra.mrb[0].mxu0 %v1438
    %v2094 = vpop.f32.mrb[0].mxu0
    %v2095 = vadd.f32 %v777, %v2094
    %v2096 = vpop.f32.mrb[0].mxu0
    %v2097 = vpop.f32.mrb[0].mxu0
    %v2098 = vadd.f32 %v782, %v2097
    %v2099 = vpop.f32.mrb[0].mxu0
    %2100 = vmatprep.mubr.bf16.mxu0 %v1441
    %2101 = vmatmul.mubr.bf16.gmra.mrb[0].mxu0 %v1440
    %v2102 = vpop.f32.mrb[0].mxu0
    %v2103 = vadd.f32 %v787, %v2102
    %v2104 = vpop.f32.mrb[0].mxu0
    %v2105 = vpop.f32.mrb[0].mxu0
    %v2106 = vadd.f32 %v792, %v2105
    %v2107 = vpop.f32.mrb[0].mxu0
    %2108 = vmatprep.mubr.bf16.mxu0 %v1443
    %2109 = vmatmul.mubr.bf16.gmra.mrb[0].mxu0 %v1442
    %v2110 = vpop.f32.mrb[0].mxu0
    %v2111 = vadd.f32 %v797, %v2110
    %v2112 = vpop.f32.mrb[0].mxu0
    %v2113 = vpop.f32.mrb[0].mxu0
    %v2114 = vadd.f32 %v802, %v2113
    %v2115 = vpop.f32.mrb[0].mxu0
    %2116 = vmatprep.mubr.bf16.mxu0 %v1445
    %2117 = vmatmul.mubr.bf16.gmra.mrb[0].mxu0 %v1444
    %v2118 = vpop.f32.mrb[0].mxu0
    %v2119 = vadd.f32 %v807, %v2118
    %v2120 = vpop.f32.mrb[0].mxu0
    %v2121 = vpop.f32.mrb[0].mxu0
    %v2122 = vadd.f32 %v812, %v2121
    %v2123 = vpop.f32.mrb[0].mxu0
    %2124 = vmatprep.mubr.bf16.mxu0 %v1447
    %2125 = vmatmul.mubr.bf16.gmra.mrb[0].mxu0 %v1446
    %v2126 = vpop.f32.mrb[0].mxu0
    %v2127 = vadd.f32 %v817, %v2126
    %v2128 = vpop.f32.mrb[0].mxu0
    %v2129 = vpop.f32.mrb[0].mxu0
    %v2130 = vadd.f32 %v822, %v2129
    %v2131 = vpop.f32.mrb[0].mxu0
    %2132 = vmatprep.mubr.bf16.mxu0 %v1449
    %2133 = vmatmul.mubr.bf16.gmra.mrb[0].mxu0 %v1448
    %v2134 = vpop.f32.mrb[0].mxu0
    %v2135 = vadd.f32 %v827, %v2134
    %v2136 = vpop.f32.mrb[0].mxu0
    %v2137 = vpop.f32.mrb[0].mxu0
    %v2138 = vadd.f32 %v832, %v2137
    %v2139 = vpop.f32.mrb[0].mxu0
    %2140 = vmatprep.mubr.bf16.mxu0 %v1451
    %2141 = vmatmul.mubr.bf16.gmra.mrb[0].mxu0 %v1450
    %v2142 = vpop.f32.mrb[0].mxu0
    %v2143 = vadd.f32 %v837, %v2142
    %v2144 = vpop.f32.mrb[0].mxu0
    %v2145 = vpop.f32.mrb[0].mxu0
    %v2146 = vadd.f32 %v842, %v2145
    %v2147 = vpop.f32.mrb[0].mxu0
    %2148 = vmatprep.mubr.bf16.mxu0 %v1453
    %2149 = vmatmul.mubr.bf16.gmra.mrb[0].mxu0 %v1452
    %v2150 = vpop.f32.mrb[0].mxu0
    %v2151 = vadd.f32 %v847, %v2150
    %v2152 = vpop.f32.mrb[0].mxu0
    %v2153 = vpop.f32.mrb[0].mxu0
    %v2154 = vadd.f32 %v852, %v2153
    %v2155 = vpop.f32.mrb[0].mxu0
    %2156 = vmatprep.mubr.bf16.mxu0 %v1455
    %2157 = vmatmul.mubr.bf16.gmra.mrb[0].mxu0 %v1454
    %v2158 = vpop.f32.mrb[0].mxu0
    %v2159 = vadd.f32 %v857, %v2158
    %v2160 = vpop.f32.mrb[0].mxu0
    %v2161 = vpop.f32.mrb[0].mxu0
    %v2162 = vadd.f32 %v862, %v2161
    %v2163 = vpop.f32.mrb[0].mxu0
    %2164 = vmatprep.mubr.bf16.mxu0 %v1457
    %2165 = vmatmul.mubr.bf16.gmra.mrb[0].mxu0 %v1456
    %v2166 = vpop.f32.mrb[0].mxu0
    %v2167 = vadd.f32 %v867, %v2166
    %v2168 = vpop.f32.mrb[0].mxu0
    %v2169 = vpop.f32.mrb[0].mxu0
    %v2170 = vadd.f32 %v872, %v2169
    %v2171 = vpop.f32.mrb[0].mxu0
    %2172 = vmatprep.mubr.bf16.mxu0 %v1459
    %2173 = vmatmul.mubr.bf16.gmra.mrb[0].mxu0 %v1458
    %v2174 = vpop.f32.mrb[0].mxu0
    %v2175 = vadd.f32 %v877, %v2174
    %v2176 = vpop.f32.mrb[0].mxu0
    %v2177 = vpop.f32.mrb[0].mxu0
    %v2178 = vadd.f32 %v882, %v2177
    %v2179 = vpop.f32.mrb[0].mxu0
    %2180 = vmatprep.mubr.bf16.mxu0 %v1461
    %2181 = vmatmul.mubr.bf16.gmra.mrb[0].mxu0 %v1460
    %v2182 = vpop.f32.mrb[0].mxu0
    %v2183 = vadd.f32 %v887, %v2182
    %v2184 = vpop.f32.mrb[0].mxu0
    %v2185 = vpop.f32.mrb[0].mxu0
    %v2186 = vadd.f32 %v892, %v2185
    %v2187 = vpop.f32.mrb[0].mxu0
    %2188 = vmatprep.mubr.bf16.mxu0 %v1463
    %2189 = vmatmul.mubr.bf16.gmra.mrb[0].mxu0 %v1462
    %v2190 = vpop.f32.mrb[0].mxu0
    %v2191 = vadd.f32 %v897, %v2190
    %v2192 = vpop.f32.mrb[0].mxu0
    %v2193 = vpop.f32.mrb[0].mxu0
    %v2194 = vadd.f32 %v902, %v2193
    %v2195 = vpop.f32.mrb[0].mxu0
    %2196 = vmatprep.mubr.bf16.mxu0 %v1465
    %2197 = vmatmul.mubr.bf16.gmra.mrb[0].mxu0 %v1464
    %v2198 = vpop.f32.mrb[0].mxu0
    %v2199 = vadd.f32 %v907, %v2198
    %v2200 = vpop.f32.mrb[0].mxu0
    %v2201 = vpop.f32.mrb[0].mxu0
    %v2202 = vadd.f32 %v912, %v2201
    %v2203 = vpop.f32.mrb[0].mxu0
    %2204 = vmatprep.mubr.bf16.mxu0 %v1467
    %2205 = vmatmul.mubr.bf16.gmra.mrb[0].mxu0 %v1466
    %v2206 = vpop.f32.mrb[0].mxu0
    %v2207 = vadd.f32 %v917, %v2206
    %v2208 = vpop.f32.mrb[0].mxu0
    %v2209 = vpop.f32.mrb[0].mxu0
    %v2210 = vadd.f32 %v922, %v2209
    %v2211 = vpop.f32.mrb[0].mxu0
    %2212 = vmatprep.mubr.bf16.mxu0 %v1469
    %2213 = vmatmul.mubr.bf16.gmra.mrb[0].mxu0 %v1468
    %v2214 = vpop.f32.mrb[0].mxu0
    %v2215 = vadd.f32 %v927, %v2214
    %v2216 = vpop.f32.mrb[0].mxu0
    %v2217 = vpop.f32.mrb[0].mxu0
    %v2218 = vadd.f32 %v932, %v2217
    %v2219 = vpop.f32.mrb[0].mxu0
    %2220 = vmatprep.mubr.bf16.mxu0 %v1471
    %2221 = vmatmul.mubr.bf16.gmra.mrb[0].mxu0 %v1470
    %v2222 = vpop.f32.mrb[0].mxu0
    %v2223 = vadd.f32 %v937, %v2222
    %v2224 = vpop.f32.mrb[0].mxu0
    %v2225 = vpop.f32.mrb[0].mxu0
    %v2226 = vadd.f32 %v942, %v2225
    %v2227 = vpop.f32.mrb[0].mxu0
    %2228 = vmatprep.mubr.bf16.mxu0 %v1473
    %2229 = vmatmul.mubr.bf16.gmra.mrb[0].mxu0 %v1472
    %v2230 = vpop.f32.mrb[0].mxu0
    %v2231 = vadd.f32 %v947, %v2230
    %v2232 = vpop.f32.mrb[0].mxu0
    %v2233 = vpop.f32.mrb[0].mxu0
    %v2234 = vadd.f32 %v952, %v2233
    %v2235 = vpop.f32.mrb[0].mxu0
    %2236 = vmatprep.mubr.bf16.mxu0 %v1475
    %2237 = vmatmul.mubr.bf16.gmra.mrb[0].mxu0 %v1474
    %v2238 = vpop.f32.mrb[0].mxu0
    %v2239 = vadd.f32 %v957, %v2238
    %v2240 = vpop.f32.mrb[0].mxu0
    %v2241 = vpop.f32.mrb[0].mxu0
    %v2242 = vadd.f32 %v962, %v2241
    %v2243 = vpop.f32.mrb[0].mxu0
    %2244 = vdwg.mxu0
    %v2245 = vmax.f32 %v1735, 0.0
    %v2246 = vmax.f32 %v1738, 0.0
    %v2247 = vmax.f32 %v1743, 0.0
    %v2248 = vmax.f32 %v1746, 0.0
    %v2249 = vmax.f32 %v1751, 0.0
    %v2250 = vmax.f32 %v1754, 0.0
    %v2251 = vmax.f32 %v1759, 0.0
    %v2252 = vmax.f32 %v1762, 0.0
    %v2253 = vmax.f32 %v1767, 0.0
    %v2254 = vmax.f32 %v1770, 0.0
    %v2255 = vmax.f32 %v1775, 0.0
    %v2256 = vmax.f32 %v1778, 0.0
    %v2257 = vmax.f32 %v1783, 0.0
    %v2258 = vmax.f32 %v1786, 0.0
    %v2259 = vmax.f32 %v1791, 0.0
    %v2260 = vmax.f32 %v1794, 0.0
    %v2261 = vmax.f32 %v1799, 0.0
    %v2262 = vmax.f32 %v1802, 0.0
    %v2263 = vmax.f32 %v1807, 0.0
    %v2264 = vmax.f32 %v1810, 0.0
    %v2265 = vmax.f32 %v1815, 0.0
    %v2266 = vmax.f32 %v1818, 0.0
    %v2267 = vmax.f32 %v1823, 0.0
    %v2268 = vmax.f32 %v1826, 0.0
    %v2269 = vmax.f32 %v1831, 0.0
    %v2270 = vmax.f32 %v1834, 0.0
    %v2271 = vmax.f32 %v1839, 0.0
    %v2272 = vmax.f32 %v1842, 0.0
    %v2273 = vmax.f32 %v1847, 0.0
    %v2274 = vmax.f32 %v1850, 0.0
    %v2275 = vmax.f32 %v1855, 0.0
    %v2276 = vmax.f32 %v1858, 0.0
    %v2277 = vmax.f32 %v1863, 0.0
    %v2278 = vmax.f32 %v1866, 0.0
    %v2279 = vmax.f32 %v1871, 0.0
    %v2280 = vmax.f32 %v1874, 0.0
    %v2281 = vmax.f32 %v1879, 0.0
    %v2282 = vmax.f32 %v1882, 0.0
    %v2283 = vmax.f32 %v1887, 0.0
    %v2284 = vmax.f32 %v1890, 0.0
    %v2285 = vmax.f32 %v1895, 0.0
    %v2286 = vmax.f32 %v1898, 0.0
    %v2287 = vmax.f32 %v1903, 0.0
    %v2288 = vmax.f32 %v1906, 0.0
    %v2289 = vmax.f32 %v1911, 0.0
    %v2290 = vmax.f32 %v1914, 0.0
    %v2291 = vmax.f32 %v1919, 0.0
    %v2292 = vmax.f32 %v1922, 0.0
    %v2293 = vmax.f32 %v1927, 0.0
    %v2294 = vmax.f32 %v1930, 0.0
    %v2295 = vmax.f32 %v1935, 0.0
    %v2296 = vmax.f32 %v1938, 0.0
    %v2297 = vmax.f32 %v1943, 0.0
    %v2298 = vmax.f32 %v1946, 0.0
    %v2299 = vmax.f32 %v1951, 0.0
    %v2300 = vmax.f32 %v1954, 0.0
    %v2301 = vmax.f32 %v1959, 0.0
    %v2302 = vmax.f32 %v1962, 0.0
    %v2303 = vmax.f32 %v1967, 0.0
    %v2304 = vmax.f32 %v1970, 0.0
    %v2305 = vmax.f32 %v1975, 0.0
    %v2306 = vmax.f32 %v1978, 0.0
    %v2307 = vmax.f32 %v1983, 0.0
    %v2308 = vmax.f32 %v1986, 0.0
    %v2309 = vmax.f32 %v1991, 0.0
    %v2310 = vmax.f32 %v1994, 0.0
    %v2311 = vmax.f32 %v1999, 0.0
    %v2312 = vmax.f32 %v2002, 0.0
    %v2313 = vmax.f32 %v2007, 0.0
    %v2314 = vmax.f32 %v2010, 0.0
    %v2315 = vmax.f32 %v2015, 0.0
    %v2316 = vmax.f32 %v2018, 0.0
    %v2317 = vmax.f32 %v2023, 0.0
    %v2318 = vmax.f32 %v2026, 0.0
    %v2319 = vmax.f32 %v2031, 0.0
    %v2320 = vmax.f32 %v2034, 0.0
    %v2321 = vmax.f32 %v2039, 0.0
    %v2322 = vmax.f32 %v2042, 0.0
    %v2323 = vmax.f32 %v2047, 0.0
    %v2324 = vmax.f32 %v2050, 0.0
    %v2325 = vmax.f32 %v2055, 0.0
    %v2326 = vmax.f32 %v2058, 0.0
    %v2327 = vmax.f32 %v2063, 0.0
    %v2328 = vmax.f32 %v2066, 0.0
    %v2329 = vmax.f32 %v2071, 0.0
    %v2330 = vmax.f32 %v2074, 0.0
    %v2331 = vmax.f32 %v2079, 0.0
    %v2332 = vmax.f32 %v2082, 0.0
    %v2333 = vmax.f32 %v2087, 0.0
    %v2334 = vmax.f32 %v2090, 0.0
    %v2335 = vmax.f32 %v2095, 0.0
    %v2336 = vmax.f32 %v2098, 0.0
    %v2337 = vmax.f32 %v2103, 0.0
    %v2338 = vmax.f32 %v2106, 0.0
    %v2339 = vmax.f32 %v2111, 0.0
    %v2340 = vmax.f32 %v2114, 0.0
    %v2341 = vmax.f32 %v2119, 0.0
    %v2342 = vmax.f32 %v2122, 0.0
    %v2343 = vmax.f32 %v2127, 0.0
    %v2344 = vmax.f32 %v2130, 0.0
    %v2345 = vmax.f32 %v2135, 0.0
    %v2346 = vmax.f32 %v2138, 0.0
    %v2347 = vmax.f32 %v2143, 0.0
    %v2348 = vmax.f32 %v2146, 0.0
    %v2349 = vmax.f32 %v2151, 0.0
    %v2350 = vmax.f32 %v2154, 0.0
    %v2351 = vmax.f32 %v2159, 0.0
    %v2352 = vmax.f32 %v2162, 0.0
    %v2353 = vmax.f32 %v2167, 0.0
    %v2354 = vmax.f32 %v2170, 0.0
    %v2355 = vmax.f32 %v2175, 0.0
    %v2356 = vmax.f32 %v2178, 0.0
    %v2357 = vmax.f32 %v2183, 0.0
    %v2358 = vmax.f32 %v2186, 0.0
    %v2359 = vmax.f32 %v2191, 0.0
    %v2360 = vmax.f32 %v2194, 0.0
    %v2361 = vmax.f32 %v2199, 0.0
    %v2362 = vmax.f32 %v2202, 0.0
    %v2363 = vmax.f32 %v2207, 0.0
    %v2364 = vmax.f32 %v2210, 0.0
    %v2365 = vmax.f32 %v2215, 0.0
    %v2366 = vmax.f32 %v2218, 0.0
    %v2367 = vmax.f32 %v2223, 0.0
    %v2368 = vmax.f32 %v2226, 0.0
    %v2369 = vmax.f32 %v2231, 0.0
    %v2370 = vmax.f32 %v2234, 0.0
    %v2371 = vmax.f32 %v2239, 0.0
    %v2372 = vmax.f32 %v2242, 0.0
    %v2373 = vld [vmem:[%s3] sm:$0xff]
    %v2374 = vld [vmem:[%s3 + $0x8] sm:$0xff]
    %v2375 = vpack.c.bf16 %v2246, %v2245
    %v2376 = vpack.c.bf16 %v2248, %v2247
    %v2377 = vpack.c.bf16 %v2250, %v2249
    %v2378 = vpack.c.bf16 %v2252, %v2251
    %v2379 = vpack.c.bf16 %v2254, %v2253
    %v2380 = vpack.c.bf16 %v2256, %v2255
    %v2381 = vpack.c.bf16 %v2258, %v2257
    %v2382 = vpack.c.bf16 %v2260, %v2259
    %v2383 = vpack.c.bf16 %v2262, %v2261
    %v2384 = vpack.c.bf16 %v2264, %v2263
    %v2385 = vpack.c.bf16 %v2266, %v2265
    %v2386 = vpack.c.bf16 %v2268, %v2267
    %v2387 = vpack.c.bf16 %v2270, %v2269
    %v2388 = vpack.c.bf16 %v2272, %v2271
    %v2389 = vpack.c.bf16 %v2274, %v2273
    %v2390 = vpack.c.bf16 %v2276, %v2275
    %v2391 = vpack.c.bf16 %v2278, %v2277
    %v2392 = vpack.c.bf16 %v2280, %v2279
    %v2393 = vpack.c.bf16 %v2282, %v2281
    %v2394 = vpack.c.bf16 %v2284, %v2283
    %v2395 = vpack.c.bf16 %v2286, %v2285
    %v2396 = vpack.c.bf16 %v2288, %v2287
    %v2397 = vpack.c.bf16 %v2290, %v2289
    %v2398 = vpack.c.bf16 %v2292, %v2291
    %v2399 = vpack.c.bf16 %v2294, %v2293
    %v2400 = vpack.c.bf16 %v2296, %v2295
    %v2401 = vpack.c.bf16 %v2298, %v2297
    %v2402 = vpack.c.bf16 %v2300, %v2299
    %v2403 = vpack.c.bf16 %v2302, %v2301
    %v2404 = vpack.c.bf16 %v2304, %v2303
    %v2405 = vpack.c.bf16 %v2306, %v2305
    %v2406 = vpack.c.bf16 %v2308, %v2307
    %v2407 = vpack.c.bf16 %v2310, %v2309
    %v2408 = vpack.c.bf16 %v2312, %v2311
    %v2409 = vpack.c.bf16 %v2314, %v2313
    %v2410 = vpack.c.bf16 %v2316, %v2315
    %v2411 = vpack.c.bf16 %v2318, %v2317
    %v2412 = vpack.c.bf16 %v2320, %v2319
    %v2413 = vpack.c.bf16 %v2322, %v2321
    %v2414 = vpack.c.bf16 %v2324, %v2323
    %v2415 = vpack.c.bf16 %v2326, %v2325
    %v2416 = vpack.c.bf16 %v2328, %v2327
    %v2417 = vpack.c.bf16 %v2330, %v2329
    %v2418 = vpack.c.bf16 %v2332, %v2331
    %v2419 = vpack.c.bf16 %v2334, %v2333
    %v2420 = vpack.c.bf16 %v2336, %v2335
    %v2421 = vpack.c.bf16 %v2338, %v2337
    %v2422 = vpack.c.bf16 %v2340, %v2339
    %v2423 = vpack.c.bf16 %v2342, %v2341
    %v2424 = vpack.c.bf16 %v2344, %v2343
    %v2425 = vpack.c.bf16 %v2346, %v2345
    %v2426 = vpack.c.bf16 %v2348, %v2347
    %v2427 = vpack.c.bf16 %v2350, %v2349
    %v2428 = vpack.c.bf16 %v2352, %v2351
    %v2429 = vpack.c.bf16 %v2354, %v2353
    %v2430 = vpack.c.bf16 %v2356, %v2355
    %v2431 = vpack.c.bf16 %v2358, %v2357
    %v2432 = vpack.c.bf16 %v2360, %v2359
    %v2433 = vpack.c.bf16 %v2362, %v2361
    %v2434 = vpack.c.bf16 %v2364, %v2363
    %v2435 = vpack.c.bf16 %v2366, %v2365
    %v2436 = vpack.c.bf16 %v2368, %v2367
    %v2437 = vpack.c.bf16 %v2370, %v2369
    %v2438 = vpack.c.bf16 %v2372, %v2371
    %v2439 = vld [vmem:[%s4] sm:$0xf]
    %2441 = vset.pattern.permute.xlu0 0
    %2442 = vperm.xlu0 %2441, %v2439
    %v2443 = vpop.permute.xlu0 %2442
    %v2447 = vcombine.high %v2373, %v2373
    %v2449 = vunpack.c.l.s4 1983009808
    %v2450 = vunpack.c.0.s8 %v2449
    %v2451 = vlaneseq
    %v2452 = vshrl.u32 %v2451, 7
    %v2453 = vsub.s32 %v2450, %v2452
    %v2454 = vrot.slane %v2373, %v2453
    %v2456 = vunpack.c.l.s4 1983009808
    %v2457 = vunpack.c.0.s8 %v2456
    %v2458 = vlaneseq
    %v2459 = vshrl.u32 %v2458, 7
    %v2460 = vsub.s32 %v2457, %v2459
    %v2461 = vrot.slane %v2447, %v2460
    %v2462 = vcombine.high %v2454, %v2454
    %v2463 = vcombine.high %v2461, %v2461
    %v2464 = vcombine.high %v2374, %v2374
    %v2466 = vunpack.c.l.s4 1983009808
    %v2467 = vunpack.c.0.s8 %v2466
    %v2468 = vlaneseq
    %v2469 = vshrl.u32 %v2468, 7
    %v2470 = vsub.s32 %v2467, %v2469
    %v2471 = vrot.slane %v2374, %v2470
    %v2473 = vunpack.c.l.s4 1983009808
    %v2474 = vunpack.c.0.s8 %v2473
    %v2475 = vlaneseq
    %v2476 = vshrl.u32 %v2475, 7
    %v2477 = vsub.s32 %v2474, %v2476
    %v2478 = vrot.slane %v2464, %v2477
    %v2479 = vcombine.high %v2471, %v2471
    %v2480 = vcombine.high %v2478, %v2478
    %2489 = vmatprep.subr.bf16.mxu0 0
    %2490 = vmatpush1.bf16.msra.mxu0 %v2375
    %2491 = vmatprep.subr.bf16.mxu0 0
    %2492 = vmatpush1.bf16.msra.mxu0 %v2376
    %2493 = vmatprep.subr.bf16.mxu0 0
    %2494 = vmatpush1.bf16.msra.mxu0 %v2377
    %2495 = vmatprep.subr.bf16.mxu0 0
    %2496 = vmatpush1.bf16.msra.mxu0 %v2378
    %2497 = vmatprep.subr.bf16.mxu0 0
    %2498 = vmatpush1.bf16.msra.mxu0 %v2379
    %2499 = vmatprep.subr.bf16.mxu0 0
    %2500 = vmatpush1.bf16.msra.mxu0 %v2380
    %2501 = vmatprep.subr.bf16.mxu0 0
    %2502 = vmatpush1.bf16.msra.mxu0 %v2381
    %2503 = vmatprep.subr.bf16.mxu0 0
    %2504 = vmatpush1.bf16.msra.mxu0 %v2382
    %2505 = vmatprep.subr.bf16.mxu0 0
    %2506 = vmatpush1.bf16.msra.mxu0 %v2383
    %2507 = vmatprep.subr.bf16.mxu0 0
    %2508 = vmatpush1.bf16.msra.mxu0 %v2384
    %2509 = vmatprep.subr.bf16.mxu0 0
    %2510 = vmatpush1.bf16.msra.mxu0 %v2385
    %2511 = vmatprep.subr.bf16.mxu0 0
    %2512 = vmatpush1.bf16.msra.mxu0 %v2386
    %2513 = vmatprep.subr.bf16.mxu0 0
    %2514 = vmatpush1.bf16.msra.mxu0 %v2387
    %2515 = vmatprep.subr.bf16.mxu0 0
    %2516 = vmatpush1.bf16.msra.mxu0 %v2388
    %2517 = vmatprep.subr.bf16.mxu0 0
    %2518 = vmatpush1.bf16.msra.mxu0 %v2389
    %2519 = vmatprep.subr.bf16.mxu0 0
    %2520 = vmatpush1.bf16.msra.mxu0 %v2390
    %2521 = vmatprep.mubr.bf16.mxu0 %v2462
    %2522 = vmatmul.mubr.bf16.gmra.mrb[0].mxu0 %v2454
    %v2523 = vpop.f32.mrb[0].mxu0
    %v2524 = vadd.f32 %v2443, %v2523
    %v2525 = vpop.f32.mrb[0].mxu0
    %v2526 = vpop.f32.mrb[0].mxu0
    %v2527 = vpop.f32.mrb[0].mxu0
    %2528 = vdwg.mxu0
    %2529 = vmatprep.subr.bf16.mxu0 0
    %2530 = vmatpush1.bf16.msra.mxu0 %v2391
    %2531 = vmatprep.subr.bf16.mxu0 0
    %2532 = vmatpush1.bf16.msra.mxu0 %v2392
    %2533 = vmatprep.subr.bf16.mxu0 0
    %2534 = vmatpush1.bf16.msra.mxu0 %v2393
    %2535 = vmatprep.subr.bf16.mxu0 0
    %2536 = vmatpush1.bf16.msra.mxu0 %v2394
    %2537 = vmatprep.subr.bf16.mxu0 0
    %2538 = vmatpush1.bf16.msra.mxu0 %v2395
    %2539 = vmatprep.subr.bf16.mxu0 0
    %2540 = vmatpush1.bf16.msra.mxu0 %v2396
    %2541 = vmatprep.subr.bf16.mxu0 0
    %2542 = vmatpush1.bf16.msra.mxu0 %v2397
    %2543 = vmatprep.subr.bf16.mxu0 0
    %2544 = vmatpush1.bf16.msra.mxu0 %v2398
    %2545 = vmatprep.subr.bf16.mxu0 0
    %2546 = vmatpush1.bf16.msra.mxu0 %v2399
    %2547 = vmatprep.subr.bf16.mxu0 0
    %2548 = vmatpush1.bf16.msra.mxu0 %v2400
    %2549 = vmatprep.subr.bf16.mxu0 0
    %2550 = vmatpush1.bf16.msra.mxu0 %v2401
    %2551 = vmatprep.subr.bf16.mxu0 0
    %2552 = vmatpush1.bf16.msra.mxu0 %v2402
    %2553 = vmatprep.subr.bf16.mxu0 0
    %2554 = vmatpush1.bf16.msra.mxu0 %v2403
    %2555 = vmatprep.subr.bf16.mxu0 0
    %2556 = vmatpush1.bf16.msra.mxu0 %v2404
    %2557 = vmatprep.subr.bf16.mxu0 0
    %2558 = vmatpush1.bf16.msra.mxu0 %v2405
    %2559 = vmatprep.subr.bf16.mxu0 0
    %2560 = vmatpush1.bf16.msra.mxu0 %v2406
    %2561 = vmatprep.mubr.bf16.mxu0 %v2463
    %2562 = vmatmul.mubr.bf16.gmra.mrb[0].mxu0 %v2461
    %v2563 = vpop.f32.mrb[0].mxu0
    %v2564 = vadd.f32 %v2524, %v2563
    %v2565 = vpop.f32.mrb[0].mxu0
    %v2566 = vpop.f32.mrb[0].mxu0
    %v2567 = vpop.f32.mrb[0].mxu0
    %2568 = vdwg.mxu0
    %2569 = vmatprep.subr.bf16.mxu0 0
    %2570 = vmatpush1.bf16.msra.mxu0 %v2407
    %2571 = vmatprep.subr.bf16.mxu0 0
    %2572 = vmatpush1.bf16.msra.mxu0 %v2408
    %2573 = vmatprep.subr.bf16.mxu0 0
    %2574 = vmatpush1.bf16.msra.mxu0 %v2409
    %2575 = vmatprep.subr.bf16.mxu0 0
    %2576 = vmatpush1.bf16.msra.mxu0 %v2410
    %2577 = vmatprep.subr.bf16.mxu0 0
    %2578 = vmatpush1.bf16.msra.mxu0 %v2411
    %2579 = vmatprep.subr.bf16.mxu0 0
    %2580 = vmatpush1.bf16.msra.mxu0 %v2412
    %2581 = vmatprep.subr.bf16.mxu0 0
    %2582 = vmatpush1.bf16.msra.mxu0 %v2413
    %2583 = vmatprep.subr.bf16.mxu0 0
    %2584 = vmatpush1.bf16.msra.mxu0 %v2414
    %2585 = vmatprep.subr.bf16.mxu0 0
    %2586 = vmatpush1.bf16.msra.mxu0 %v2415
    %2587 = vmatprep.subr.bf16.mxu0 0
    %2588 = vmatpush1.bf16.msra.mxu0 %v2416
    %2589 = vmatprep.subr.bf16.mxu0 0
    %2590 = vmatpush1.bf16.msra.mxu0 %v2417
    %2591 = vmatprep.subr.bf16.mxu0 0
    %2592 = vmatpush1.bf16.msra.mxu0 %v2418
    %2593 = vmatprep.subr.bf16.mxu0 0
    %2594 = vmatpush1.bf16.msra.mxu0 %v2419
    %2595 = vmatprep.subr.bf16.mxu0 0
    %2596 = vmatpush1.bf16.msra.mxu0 %v2420
    %2597 = vmatprep.subr.bf16.mxu0 0
    %2598 = vmatpush1.bf16.msra.mxu0 %v2421
    %2599 = vmatprep.subr.bf16.mxu0 0
    %2600 = vmatpush1.bf16.msra.mxu0 %v2422
    %2601 = vmatprep.mubr.bf16.mxu0 %v2479
    %2602 = vmatmul.mubr.bf16.gmra.mrb[0].mxu0 %v2471
    %v2603 = vpop.f32.mrb[0].mxu0
    %v2604 = vadd.f32 %v2564, %v2603
    %v2605 = vpop.f32.mrb[0].mxu0
    %v2606 = vpop.f32.mrb[0].mxu0
    %v2607 = vpop.f32.mrb[0].mxu0
    %2608 = vdwg.mxu0
    %2609 = vmatprep.subr.bf16.mxu0 0
    %2610 = vmatpush1.bf16.msra.mxu0 %v2423
    %2611 = vmatprep.subr.bf16.mxu0 0
    %2612 = vmatpush1.bf16.msra.mxu0 %v2424
    %2613 = vmatprep.subr.bf16.mxu0 0
    %2614 = vmatpush1.bf16.msra.mxu0 %v2425
    %2615 = vmatprep.subr.bf16.mxu0 0
    %2616 = vmatpush1.bf16.msra.mxu0 %v2426
    %2617 = vmatprep.subr.bf16.mxu0 0
    %2618 = vmatpush1.bf16.msra.mxu0 %v2427
    %2619 = vmatprep.subr.bf16.mxu0 0
    %2620 = vmatpush1.bf16.msra.mxu0 %v2428
    %2621 = vmatprep.subr.bf16.mxu0 0
    %2622 = vmatpush1.bf16.msra.mxu0 %v2429
    %2623 = vmatprep.subr.bf16.mxu0 0
    %2624 = vmatpush1.bf16.msra.mxu0 %v2430
    %2625 = vmatprep.subr.bf16.mxu0 0
    %2626 = vmatpush1.bf16.msra.mxu0 %v2431
    %2627 = vmatprep.subr.bf16.mxu0 0
    %2628 = vmatpush1.bf16.msra.mxu0 %v2432
    %2629 = vmatprep.subr.bf16.mxu0 0
    %2630 = vmatpush1.bf16.msra.mxu0 %v2433
    %2631 = vmatprep.subr.bf16.mxu0 0
    %2632 = vmatpush1.bf16.msra.mxu0 %v2434
    %2633 = vmatprep.subr.bf16.mxu0 0
    %2634 = vmatpush1.bf16.msra.mxu0 %v2435
    %2635 = vmatprep.subr.bf16.mxu0 0
    %2636 = vmatpush1.bf16.msra.mxu0 %v2436
    %2637 = vmatprep.subr.bf16.mxu0 0
    %2638 = vmatpush1.bf16.msra.mxu0 %v2437
    %2639 = vmatprep.subr.bf16.mxu0 0
    %2640 = vmatpush1.bf16.msra.mxu0 %v2438
    %2641 = vmatprep.mubr.bf16.mxu0 %v2480
    %2642 = vmatmul.mubr.bf16.gmra.mrb[0].mxu0 %v2478
    %v2643 = vpop.f32.mrb[0].mxu0
    %v2644 = vadd.f32 %v2604, %v2643
    %v2645 = vpop.f32.mrb[0].mxu0
    %v2646 = vpop.f32.mrb[0].mxu0
    %v2647 = vpop.f32.mrb[0].mxu0
    %2648 = vdwg.mxu0
    %2649 = vst [vmem:[#allocation5] sm:$0xf] %v2644
    // Predicated region
    $region26: #{tpu_custom_call.1} parent=1 // pred_check
      _
    $region27: #{tpu_custom_call.1} parent=1 // pred_check_branch
      %2651 = sbr.rel (0) target = $region29
    $region28: #{tpu_custom_call.1} parent=1 // pred_region
      %s2653 = ssub.s32 64, 64
      %2654 = vsyncadd [#allocation4], %s2653
      %s2656 = sshll.u32 [#allocation5], 4
      %s2657 = int_to_ptr.vmem [resolvable:$true] %s2656
      %2659 = dma.vmem_to_hbm [thread:$0]  %s2657, 64, %s5, [#allocation4]
    $region29: #{tpu_custom_call.1} parent=1 // pred_fallthru
      _
    // Predicated region
    $region30: #{tpu_custom_call.1} parent=1 // pred_check
      _
    $region31: #{tpu_custom_call.1} parent=1 // pred_check_branch
      %2661 = sbr.rel (0) target = $region33
    $region32: #{tpu_custom_call.1} parent=1 // pred_region
      %2662 = dma.done [#allocation4], 64
    $region33: #{tpu_custom_call.1} parent=1 // pred_fallthru
      _
    %2663 = vsyncpa [#allocation3], 1
    %2664 = vsyncpa [#allocation4], 1

</llo_original>
